<compile_context>
chip_gen: v5e
topology: v5e:2x2
jax: 0.10.0
libtpu: 0.0.40
codegen_flags: <defaults>
</compile_context>

<pallas_src>
import jax
import jax.numpy as jnp
from jax.experimental import pallas as pl
from jax.experimental.pallas import tpu as pltpu


def _gru_recurrent_kernel(gi_ref, h0_ref, whh_ref, bhn_ref,
                          y_ref, hT_ref, h_scratch):
    # grid = (batch_blocks, time_chunks); time is the inner, sequential axis.
    c = pl.program_id(1)
    nchunks = pl.num_programs(1)

    # (Re)initialize the carried hidden state at the start of each batch block.
    @pl.when(c == 0)
    def _():
        h_scratch[...] = h0_ref[...].astype(jnp.float32)

    # Hidden-to-hidden weights (already transposed: h @ w_g == h @ W_hg.T) and b_hn,
    # loaded once per chunk. Gate split happens on the leading (non-lane) axis.
    w_r = whh_ref[0]            # (H, H)
    w_z = whh_ref[1]
    w_n = whh_ref[2]
    b_hn = bhn_ref[...]         # (1, H)

    tc = y_ref.shape[0]         # static timesteps in this chunk

    def step(t, h):
        g = gi_ref[t]           # (3, B, H): precomputed input projection (+ fused biases)
        gh_r = jnp.dot(h, w_r, preferred_element_type=jnp.float32)
        gh_z = jnp.dot(h, w_z, preferred_element_type=jnp.float32)
        gh_n = jnp.dot(h, w_n, preferred_element_type=jnp.float32) + b_hn
        r = jax.nn.sigmoid(g[0] + gh_r)
        z = jax.nn.sigmoid(g[1] + gh_z)
        n = jnp.tanh(g[2] + r * gh_n)
        h_new = (1.0 - z) * n + z * h
        y_ref[t] = h_new.astype(y_ref.dtype)
        return h_new

    h_final = jax.lax.fori_loop(0, tc, step, h_scratch[...], unroll=tc <= 16)
    h_scratch[...] = h_final

    # Write the final hidden state only once, on the last time chunk.
    @pl.when(c == nchunks - 1)
    def _():
        hT_ref[...] = h_final.astype(hT_ref.dtype)


def gru_flowtron_forward(x, hiddens, params, *, time_chunk=64, batch_block=None):
    """x: (T, B, I) f32; hiddens: (1, B, H) f32; params: PyTorch-layout GRU weights."""
    T, B, I = x.shape
    H = hiddens.shape[-1]

    wih3 = params["weight_ih"].reshape(3, H, I)   # gates stacked [r, z, n]
    whh3 = params["weight_hh"].reshape(3, H, H)
    bih3 = params["bias_ih"].reshape(3, H)
    bhh3 = params["bias_hh"].reshape(3, H)

    # --- Time-parallel input projection (independent of h): one big matmul. ---
    # Fold b_ih for all gates and b_hh for the r/z gates into gi; b_hn must stay
    # inside r * (W_hn h + b_hn) and is passed to the kernel separately.
    gate_mask = jnp.array([1.0, 1.0, 0.0], dtype=jnp.float32)
    b_fused = bih3 + bhh3 * gate_mask[:, None]                        # (3, H)
    gi = jnp.einsum("tbi,ghi->tgbh", x, wih3,
                    precision=jax.lax.Precision.HIGHEST,
                    preferred_element_type=jnp.float32)
    gi = gi + b_fused[None, :, None, :]                               # (T, 3, B, H)

    whh_t = jnp.transpose(whh3, (0, 2, 1))                            # (3, H, H)
    bhn = bhh3[2].reshape(1, H)                                       # (1, H)
    h0 = hiddens[0]                                                   # (B, H)

    # Chunk sizes (divisors of T / B; batch block must stay a multiple of 8 or == B).
    tc = min(time_chunk, T)
    while T % tc:
        tc -= 1
    bb = B if batch_block is None else min(batch_block, B)
    while B % bb:
        bb -= 1

    grid = (B // bb, T // tc)

    y, h_n = pl.pallas_call(
        _gru_recurrent_kernel,
        out_shape=(
            jax.ShapeDtypeStruct((T, B, H), x.dtype),
            jax.ShapeDtypeStruct((B, H), x.dtype),
        ),
        grid_spec=pltpu.PrefetchScalarGridSpec(
            num_scalar_prefetch=0,
            grid=grid,
            in_specs=[
                pl.BlockSpec((tc, 3, bb, H), lambda b, c: (c, 0, b, 0)),  # gi chunk
                pl.BlockSpec((bb, H), lambda b, c: (b, 0)),               # h0
                pl.BlockSpec((3, H, H), lambda b, c: (0, 0, 0)),          # W_hh^T (per gate)
                pl.BlockSpec((1, H), lambda b, c: (0, 0)),                # b_hn
            ],
            out_specs=[
                pl.BlockSpec((tc, bb, H), lambda b, c: (c, b, 0)),        # y chunk
                pl.BlockSpec((bb, H), lambda b, c: (b, 0)),               # final hidden
            ],
            scratch_shapes=[pltpu.VMEM((bb, H), jnp.float32)],
        ),
        compiler_params=pltpu.CompilerParams(
            # batch blocks are independent (megacore-shardable); time is sequential.
            dimension_semantics=("parallel", "arbitrary"),
        ),
    )(gi, h0, whh_t, bhn)

    return y, h_n[None]                                               # (T,B,H), (1,B,H)


def gru_reference(x, hiddens, params):
    """Pure-JAX reference (lax.scan) matching PyTorch GRU semantics."""
    H = hiddens.shape[-1]
    wih, whh = params["weight_ih"], params["weight_hh"]
    bih, bhh = params["bias_ih"], params["bias_hh"]
    hp = jax.lax.Precision.HIGHEST

    def step(h, x_t):
        gi = jnp.dot(x_t, wih.T, precision=hp) + bih
        gh = jnp.dot(h, whh.T, precision=hp) + bhh
        i_r, i_z, i_n = gi[:, :H], gi[:, H:2 * H], gi[:, 2 * H:]
        h_r, h_z, h_n = gh[:, :H], gh[:, H:2 * H], gh[:, 2 * H:]
        r = jax.nn.sigmoid(i_r + h_r)
        z = jax.nn.sigmoid(i_z + h_z)
        n = jnp.tanh(i_n + r * h_n)
        h_new = (1.0 - z) * n + z * h
        return h_new, h_new

    h_last, ys = jax.lax.scan(step, hiddens[0], x)
    return ys, h_last[None]


if __name__ == "__main__":
    # Small shapes implied by a single-layer GRU forward.
    T, B, I, H = 8, 8, 16, 32

    key = jax.random.PRNGKey(0)
    k_x, k_h, k_wi, k_wh, k_bi, k_bh = jax.random.split(key, 6)

    # PyTorch GRU default init: U(-1/sqrt(H), 1/sqrt(H)).
    bound = 1.0 / jnp.sqrt(jnp.float32(H))
    params = {
        "weight_ih": jax.random.uniform(k_wi, (3 * H, I), jnp.float32, -bound, bound),
        "weight_hh": jax.random.uniform(k_wh, (3 * H, H), jnp.float32, -bound, bound),
        "bias_ih": jax.random.uniform(k_bi, (3 * H,), jnp.float32, -bound, bound),
        "bias_hh": jax.random.uniform(k_bh, (3 * H,), jnp.float32, -bound, bound),
    }

    x = jax.random.normal(k_x, (T, B, I), jnp.float32)        # (seq, batch, input)
    hiddens = jax.random.normal(k_h, (1, B, H), jnp.float32)  # (num_layers, batch, hidden)

    y, h_n = gru_flowtron_forward(x, hiddens, params)
    y = jax.block_until_ready(y)
    h_n = jax.block_until_ready(h_n)

    # Sanity check against a pure-JAX reference.
    y_ref, h_ref = gru_reference(x, hiddens, params)
    assert jnp.allclose(y, y_ref, rtol=1e-3, atol=1e-4), "output mismatch"
    assert jnp.allclose(h_n, h_ref, rtol=1e-3, atol=1e-4), "hidden mismatch"

    print("KERNEL_OK")
</pallas_src>

<mosaic_0001>
module attributes {stable_mosaic.version = 11 : i64} {
  func.func @_gru_recurrent_kernel(%arg0: i32, %arg1: i32, %arg2: memref<8x3x8x32xf32, #tpu.memory_space<vmem>>, %arg3: memref<8x32xf32, #tpu.memory_space<vmem>>, %arg4: memref<3x32x32xf32, #tpu.memory_space<vmem>>, %arg5: memref<1x32xf32, #tpu.memory_space<vmem>>, %arg6: memref<8x8x32xf32, #tpu.memory_space<vmem>>, %arg7: memref<8x32xf32, #tpu.memory_space<vmem>>, %arg8: memref<8x32xf32, #tpu.memory_space<vmem>>) attributes {dimension_semantics = [#tpu.dimension_semantics<parallel>, #tpu.dimension_semantics<arbitrary>], iteration_bounds = array<i64: 1, 1>, scalar_prefetch = 0 : i64, scratch_operands = 1 : i64, tpu.core_type = #tpu.core_type<tc>, window_params = [{transform_indices = @transform_0, window_bounds = array<i64: 8, 3, 8, 32>}, {transform_indices = @transform_1, window_bounds = array<i64: 8, 32>}, {pipeline_mode = #tpu.pipeline_mode<synchronous>, transform_indices = @transform_2, window_bounds = array<i64: 3, 32, 32>}, {pipeline_mode = #tpu.pipeline_mode<synchronous>, transform_indices = @transform_3, window_bounds = array<i64: 1, 32>}, {transform_indices = @transform_4, window_bounds = array<i64: 8, 8, 32>}, {transform_indices = @transform_5, window_bounds = array<i64: 8, 32>}]} {
    %c0_i32 = arith.constant 0 : i32
    %0 = arith.cmpi eq, %arg1, %c0_i32 : i32
    %1 = arith.extui %0 : i1 to i32
    %c0_i32_0 = arith.constant 0 : i32
    %2 = arith.cmpi ne, %1, %c0_i32_0 : i32
    scf.if %2 {
      %c0_103 = arith.constant 0 : index
      %c0_104 = arith.constant 0 : index
      %319 = vector.load %arg3[%c0_103, %c0_104] : memref<8x32xf32, #tpu.memory_space<vmem>>, vector<8x32xf32>
      %c0_105 = arith.constant 0 : index
      %c0_106 = arith.constant 0 : index
      %320 = vector.load %arg8[%c0_105, %c0_106] : memref<8x32xf32, #tpu.memory_space<vmem>>, vector<8x32xf32>
      tpu.vector_store %arg8[%c0_105, %c0_106], %319 {strides = array<i32>} : memref<8x32xf32, #tpu.memory_space<vmem>>, vector<8x32xf32>,
    } else {
    }
    %c0 = arith.constant 0 : index
    %c0_1 = arith.constant 0 : index
    %c0_2 = arith.constant 0 : index
    %3 = vector.load %arg4[%c0, %c0_1, %c0_2] : memref<3x32x32xf32, #tpu.memory_space<vmem>>, vector<1x32x32xf32>
    %4 = vector.shape_cast %3 : vector<1x32x32xf32> to vector<32x32xf32>
    %c1 = arith.constant 1 : index
    %c0_3 = arith.constant 0 : index
    %c0_4 = arith.constant 0 : index
    %5 = vector.load %arg4[%c1, %c0_3, %c0_4] : memref<3x32x32xf32, #tpu.memory_space<vmem>>, vector<1x32x32xf32>
    %6 = vector.shape_cast %5 : vector<1x32x32xf32> to vector<32x32xf32>
    %c2 = arith.constant 2 : index
    %c0_5 = arith.constant 0 : index
    %c0_6 = arith.constant 0 : index
    %7 = vector.load %arg4[%c2, %c0_5, %c0_6] : memref<3x32x32xf32, #tpu.memory_space<vmem>>, vector<1x32x32xf32>
    %8 = vector.shape_cast %7 : vector<1x32x32xf32> to vector<32x32xf32>
    %c0_7 = arith.constant 0 : index
    %c0_8 = arith.constant 0 : index
    %9 = vector.load %arg5[%c0_7, %c0_8] : memref<1x32xf32, #tpu.memory_space<vmem>>, vector<1x32xf32>
    %c0_9 = arith.constant 0 : index
    %c0_10 = arith.constant 0 : index
    %10 = vector.load %arg8[%c0_9, %c0_10] : memref<8x32xf32, #tpu.memory_space<vmem>>, vector<8x32xf32>
    %c0_i32_11 = arith.constant 0 : i32
    %11 = arith.index_cast %c0_i32_11 : i32 to index
    %c0_12 = arith.constant 0 : index
    %c0_13 = arith.constant 0 : index
    %c0_14 = arith.constant 0 : index
    %12 = vector.load %arg2[%11, %c0_12, %c0_13, %c0_14] : memref<8x3x8x32xf32, #tpu.memory_space<vmem>>, vector<1x3x8x32xf32>
    %13 = vector.shape_cast %12 : vector<1x3x8x32xf32> to vector<3x8x32xf32>
    %cst = arith.constant dense<0.000000e+00> : vector<8x32xf32>
    %14 = tpu.matmul %10, %4, %cst {dimension_numbers = #tpu.dot_dimension_numbers<[1], [0], [0], [1], [0, 0, 1, 1], [], []>} : vector<8x32xf32>, vector<32x32xf32>, vector<8x32xf32> -> vector<8x32xf32>
    %cst_15 = arith.constant dense<0.000000e+00> : vector<8x32xf32>
    %15 = tpu.matmul %10, %6, %cst_15 {dimension_numbers = #tpu.dot_dimension_numbers<[1], [0], [0], [1], [0, 0, 1, 1], [], []>} : vector<8x32xf32>, vector<32x32xf32>, vector<8x32xf32> -> vector<8x32xf32>
    %cst_16 = arith.constant dense<0.000000e+00> : vector<8x32xf32>
    %16 = tpu.matmul %10, %8, %cst_16 {dimension_numbers = #tpu.dot_dimension_numbers<[1], [0], [0], [1], [0, 0, 1, 1], [], []>} : vector<8x32xf32>, vector<32x32xf32>, vector<8x32xf32> -> vector<8x32xf32>
    %17 = vector.broadcast %9 : vector<1x32xf32> to vector<8x32xf32>
    %18 = arith.addf %16, %17 : vector<8x32xf32>
    %19 = vector.extract_strided_slice %13 {offsets = [0, 0, 0], sizes = [1, 8, 32], strides = [1, 1, 1]} : vector<3x8x32xf32> to vector<1x8x32xf32>
    %20 = vector.shape_cast %19 : vector<1x8x32xf32> to vector<8x32xf32>
    %21 = arith.addf %20, %14 : vector<8x32xf32>
    %22 = arith.negf %21 : vector<8x32xf32>
    %23 = math.exp %22 : vector<8x32xf32>
    %cst_17 = arith.constant 1.000000e+00 : f32
    %24 = vector.broadcast %cst_17 : f32 to vector<8x32xf32>
    %25 = arith.addf %24, %23 : vector<8x32xf32>
    %26 = arith.divf %24, %25 : vector<8x32xf32>
    %27 = vector.extract_strided_slice %13 {offsets = [1, 0, 0], sizes = [1, 8, 32], strides = [1, 1, 1]} : vector<3x8x32xf32> to vector<1x8x32xf32>
    %28 = vector.shape_cast %27 : vector<1x8x32xf32> to vector<8x32xf32>
    %29 = arith.addf %28, %15 : vector<8x32xf32>
    %30 = arith.negf %29 : vector<8x32xf32>
    %31 = math.exp %30 : vector<8x32xf32>
    %cst_18 = arith.constant 1.000000e+00 : f32
    %32 = vector.broadcast %cst_18 : f32 to vector<8x32xf32>
    %33 = arith.addf %32, %31 : vector<8x32xf32>
    %34 = arith.divf %32, %33 : vector<8x32xf32>
    %35 = vector.extract_strided_slice %13 {offsets = [2, 0, 0], sizes = [1, 8, 32], strides = [1, 1, 1]} : vector<3x8x32xf32> to vector<1x8x32xf32>
    %36 = vector.shape_cast %35 : vector<1x8x32xf32> to vector<8x32xf32>
    %37 = arith.mulf %26, %18 : vector<8x32xf32>
    %38 = arith.addf %36, %37 : vector<8x32xf32>
    %39 = math.tanh %38 : vector<8x32xf32>
    %cst_19 = arith.constant 1.000000e+00 : f32
    %40 = vector.broadcast %cst_19 : f32 to vector<8x32xf32>
    %41 = arith.subf %40, %34 : vector<8x32xf32>
    %42 = arith.mulf %41, %39 : vector<8x32xf32>
    %43 = arith.mulf %34, %10 : vector<8x32xf32>
    %44 = arith.addf %42, %43 : vector<8x32xf32>
    %45 = arith.index_cast %c0_i32_11 : i32 to index
    %c0_20 = arith.constant 0 : index
    %c0_21 = arith.constant 0 : index
    %46 = vector.load %arg6[%45, %c0_20, %c0_21] : memref<8x8x32xf32, #tpu.memory_space<vmem>>, vector<1x8x32xf32>
    %47 = vector.shape_cast %46 : vector<1x8x32xf32> to vector<8x32xf32>
    %48 = vector.shape_cast %44 : vector<8x32xf32> to vector<1x8x32xf32>
    tpu.vector_store %arg6[%45, %c0_20, %c0_21], %48 {strides = array<i32>} : memref<8x8x32xf32, #tpu.memory_space<vmem>>, vector<1x8x32xf32>,
    %c1_i32 = arith.constant 1 : i32
    %49 = arith.index_cast %c1_i32 : i32 to index
    %c0_22 = arith.constant 0 : index
    %c0_23 = arith.constant 0 : index
    %c0_24 = arith.constant 0 : index
    %50 = vector.load %arg2[%49, %c0_22, %c0_23, %c0_24] : memref<8x3x8x32xf32, #tpu.memory_space<vmem>>, vector<1x3x8x32xf32>
    %51 = vector.shape_cast %50 : vector<1x3x8x32xf32> to vector<3x8x32xf32>
    %cst_25 = arith.constant dense<0.000000e+00> : vector<8x32xf32>
    %52 = tpu.matmul %44, %4, %cst_25 {dimension_numbers = #tpu.dot_dimension_numbers<[1], [0], [0], [1], [0, 0, 1, 1], [], []>} : vector<8x32xf32>, vector<32x32xf32>, vector<8x32xf32> -> vector<8x32xf32>
    %cst_26 = arith.constant dense<0.000000e+00> : vector<8x32xf32>
    %53 = tpu.matmul %44, %6, %cst_26 {dimension_numbers = #tpu.dot_dimension_numbers<[1], [0], [0], [1], [0, 0, 1, 1], [], []>} : vector<8x32xf32>, vector<32x32xf32>, vector<8x32xf32> -> vector<8x32xf32>
    %cst_27 = arith.constant dense<0.000000e+00> : vector<8x32xf32>
    %54 = tpu.matmul %44, %8, %cst_27 {dimension_numbers = #tpu.dot_dimension_numbers<[1], [0], [0], [1], [0, 0, 1, 1], [], []>} : vector<8x32xf32>, vector<32x32xf32>, vector<8x32xf32> -> vector<8x32xf32>
    %55 = vector.broadcast %9 : vector<1x32xf32> to vector<8x32xf32>
    %56 = arith.addf %54, %55 : vector<8x32xf32>
    %57 = vector.extract_strided_slice %51 {offsets = [0, 0, 0], sizes = [1, 8, 32], strides = [1, 1, 1]} : vector<3x8x32xf32> to vector<1x8x32xf32>
    %58 = vector.shape_cast %57 : vector<1x8x32xf32> to vector<8x32xf32>
    %59 = arith.addf %58, %52 : vector<8x32xf32>
    %60 = arith.negf %59 : vector<8x32xf32>
    %61 = math.exp %60 : vector<8x32xf32>
    %cst_28 = arith.constant 1.000000e+00 : f32
    %62 = vector.broadcast %cst_28 : f32 to vector<8x32xf32>
    %63 = arith.addf %62, %61 : vector<8x32xf32>
    %64 = arith.divf %62, %63 : vector<8x32xf32>
    %65 = vector.extract_strided_slice %51 {offsets = [1, 0, 0], sizes = [1, 8, 32], strides = [1, 1, 1]} : vector<3x8x32xf32> to vector<1x8x32xf32>
    %66 = vector.shape_cast %65 : vector<1x8x32xf32> to vector<8x32xf32>
    %67 = arith.addf %66, %53 : vector<8x32xf32>
    %68 = arith.negf %67 : vector<8x32xf32>
    %69 = math.exp %68 : vector<8x32xf32>
    %cst_29 = arith.constant 1.000000e+00 : f32
    %70 = vector.broadcast %cst_29 : f32 to vector<8x32xf32>
    %71 = arith.addf %70, %69 : vector<8x32xf32>
    %72 = arith.divf %70, %71 : vector<8x32xf32>
    %73 = vector.extract_strided_slice %51 {offsets = [2, 0, 0], sizes = [1, 8, 32], strides = [1, 1, 1]} : vector<3x8x32xf32> to vector<1x8x32xf32>
    %74 = vector.shape_cast %73 : vector<1x8x32xf32> to vector<8x32xf32>
    %75 = arith.mulf %64, %56 : vector<8x32xf32>
    %76 = arith.addf %74, %75 : vector<8x32xf32>
    %77 = math.tanh %76 : vector<8x32xf32>
    %cst_30 = arith.constant 1.000000e+00 : f32
    %78 = vector.broadcast %cst_30 : f32 to vector<8x32xf32>
    %79 = arith.subf %78, %72 : vector<8x32xf32>
    %80 = arith.mulf %79, %77 : vector<8x32xf32>
    %81 = arith.mulf %72, %44 : vector<8x32xf32>
    %82 = arith.addf %80, %81 : vector<8x32xf32>
    %83 = arith.index_cast %c1_i32 : i32 to index
    %c0_31 = arith.constant 0 : index
    %c0_32 = arith.constant 0 : index
    %84 = vector.load %arg6[%83, %c0_31, %c0_32] : memref<8x8x32xf32, #tpu.memory_space<vmem>>, vector<1x8x32xf32>
    %85 = vector.shape_cast %84 : vector<1x8x32xf32> to vector<8x32xf32>
    %86 = vector.shape_cast %82 : vector<8x32xf32> to vector<1x8x32xf32>
    tpu.vector_store %arg6[%83, %c0_31, %c0_32], %86 {strides = array<i32>} : memref<8x8x32xf32, #tpu.memory_space<vmem>>, vector<1x8x32xf32>,
    %c2_i32 = arith.constant 2 : i32
    %87 = arith.index_cast %c2_i32 : i32 to index
    %c0_33 = arith.constant 0 : index
    %c0_34 = arith.constant 0 : index
    %c0_35 = arith.constant 0 : index
    %88 = vector.load %arg2[%87, %c0_33, %c0_34, %c0_35] : memref<8x3x8x32xf32, #tpu.memory_space<vmem>>, vector<1x3x8x32xf32>
    %89 = vector.shape_cast %88 : vector<1x3x8x32xf32> to vector<3x8x32xf32>
    %cst_36 = arith.constant dense<0.000000e+00> : vector<8x32xf32>
    %90 = tpu.matmul %82, %4, %cst_36 {dimension_numbers = #tpu.dot_dimension_numbers<[1], [0], [0], [1], [0, 0, 1, 1], [], []>} : vector<8x32xf32>, vector<32x32xf32>, vector<8x32xf32> -> vector<8x32xf32>
    %cst_37 = arith.constant dense<0.000000e+00> : vector<8x32xf32>
    %91 = tpu.matmul %82, %6, %cst_37 {dimension_numbers = #tpu.dot_dimension_numbers<[1], [0], [0], [1], [0, 0, 1, 1], [], []>} : vector<8x32xf32>, vector<32x32xf32>, vector<8x32xf32> -> vector<8x32xf32>
    %cst_38 = arith.constant dense<0.000000e+00> : vector<8x32xf32>
    %92 = tpu.matmul %82, %8, %cst_38 {dimension_numbers = #tpu.dot_dimension_numbers<[1], [0], [0], [1], [0, 0, 1, 1], [], []>} : vector<8x32xf32>, vector<32x32xf32>, vector<8x32xf32> -> vector<8x32xf32>
    %93 = vector.broadcast %9 : vector<1x32xf32> to vector<8x32xf32>
    %94 = arith.addf %92, %93 : vector<8x32xf32>
    %95 = vector.extract_strided_slice %89 {offsets = [0, 0, 0], sizes = [1, 8, 32], strides = [1, 1, 1]} : vector<3x8x32xf32> to vector<1x8x32xf32>
    %96 = vector.shape_cast %95 : vector<1x8x32xf32> to vector<8x32xf32>
    %97 = arith.addf %96, %90 : vector<8x32xf32>
    %98 = arith.negf %97 : vector<8x32xf32>
    %99 = math.exp %98 : vector<8x32xf32>
    %cst_39 = arith.constant 1.000000e+00 : f32
    %100 = vector.broadcast %cst_39 : f32 to vector<8x32xf32>
    %101 = arith.addf %100, %99 : vector<8x32xf32>
    %102 = arith.divf %100, %101 : vector<8x32xf32>
    %103 = vector.extract_strided_slice %89 {offsets = [1, 0, 0], sizes = [1, 8, 32], strides = [1, 1, 1]} : vector<3x8x32xf32> to vector<1x8x32xf32>
    %104 = vector.shape_cast %103 : vector<1x8x32xf32> to vector<8x32xf32>
    %105 = arith.addf %104, %91 : vector<8x32xf32>
    %106 = arith.negf %105 : vector<8x32xf32>
    %107 = math.exp %106 : vector<8x32xf32>
    %cst_40 = arith.constant 1.000000e+00 : f32
    %108 = vector.broadcast %cst_40 : f32 to vector<8x32xf32>
    %109 = arith.addf %108, %107 : vector<8x32xf32>
    %110 = arith.divf %108, %109 : vector<8x32xf32>
    %111 = vector.extract_strided_slice %89 {offsets = [2, 0, 0], sizes = [1, 8, 32], strides = [1, 1, 1]} : vector<3x8x32xf32> to vector<1x8x32xf32>
    %112 = vector.shape_cast %111 : vector<1x8x32xf32> to vector<8x32xf32>
    %113 = arith.mulf %102, %94 : vector<8x32xf32>
    %114 = arith.addf %112, %113 : vector<8x32xf32>
    %115 = math.tanh %114 : vector<8x32xf32>
    %cst_41 = arith.constant 1.000000e+00 : f32
    %116 = vector.broadcast %cst_41 : f32 to vector<8x32xf32>
    %117 = arith.subf %116, %110 : vector<8x32xf32>
    %118 = arith.mulf %117, %115 : vector<8x32xf32>
    %119 = arith.mulf %110, %82 : vector<8x32xf32>
    %120 = arith.addf %118, %119 : vector<8x32xf32>
    %121 = arith.index_cast %c2_i32 : i32 to index
    %c0_42 = arith.constant 0 : index
    %c0_43 = arith.constant 0 : index
    %122 = vector.load %arg6[%121, %c0_42, %c0_43] : memref<8x8x32xf32, #tpu.memory_space<vmem>>, vector<1x8x32xf32>
    %123 = vector.shape_cast %122 : vector<1x8x32xf32> to vector<8x32xf32>
    %124 = vector.shape_cast %120 : vector<8x32xf32> to vector<1x8x32xf32>
    tpu.vector_store %arg6[%121, %c0_42, %c0_43], %124 {strides = array<i32>} : memref<8x8x32xf32, #tpu.memory_space<vmem>>, vector<1x8x32xf32>,
    %c3_i32 = arith.constant 3 : i32
    %125 = arith.index_cast %c3_i32 : i32 to index
    %c0_44 = arith.constant 0 : index
    %c0_45 = arith.constant 0 : index
    %c0_46 = arith.constant 0 : index
    %126 = vector.load %arg2[%125, %c0_44, %c0_45, %c0_46] : memref<8x3x8x32xf32, #tpu.memory_space<vmem>>, vector<1x3x8x32xf32>
    %127 = vector.shape_cast %126 : vector<1x3x8x32xf32> to vector<3x8x32xf32>
    %cst_47 = arith.constant dense<0.000000e+00> : vector<8x32xf32>
    %128 = tpu.matmul %120, %4, %cst_47 {dimension_numbers = #tpu.dot_dimension_numbers<[1], [0], [0], [1], [0, 0, 1, 1], [], []>} : vector<8x32xf32>, vector<32x32xf32>, vector<8x32xf32> -> vector<8x32xf32>
    %cst_48 = arith.constant dense<0.000000e+00> : vector<8x32xf32>
    %129 = tpu.matmul %120, %6, %cst_48 {dimension_numbers = #tpu.dot_dimension_numbers<[1], [0], [0], [1], [0, 0, 1, 1], [], []>} : vector<8x32xf32>, vector<32x32xf32>, vector<8x32xf32> -> vector<8x32xf32>
    %cst_49 = arith.constant dense<0.000000e+00> : vector<8x32xf32>
    %130 = tpu.matmul %120, %8, %cst_49 {dimension_numbers = #tpu.dot_dimension_numbers<[1], [0], [0], [1], [0, 0, 1, 1], [], []>} : vector<8x32xf32>, vector<32x32xf32>, vector<8x32xf32> -> vector<8x32xf32>
    %131 = vector.broadcast %9 : vector<1x32xf32> to vector<8x32xf32>
    %132 = arith.addf %130, %131 : vector<8x32xf32>
    %133 = vector.extract_strided_slice %127 {offsets = [0, 0, 0], sizes = [1, 8, 32], strides = [1, 1, 1]} : vector<3x8x32xf32> to vector<1x8x32xf32>
    %134 = vector.shape_cast %133 : vector<1x8x32xf32> to vector<8x32xf32>
    %135 = arith.addf %134, %128 : vector<8x32xf32>
    %136 = arith.negf %135 : vector<8x32xf32>
    %137 = math.exp %136 : vector<8x32xf32>
    %cst_50 = arith.constant 1.000000e+00 : f32
    %138 = vector.broadcast %cst_50 : f32 to vector<8x32xf32>
    %139 = arith.addf %138, %137 : vector<8x32xf32>
    %140 = arith.divf %138, %139 : vector<8x32xf32>
    %141 = vector.extract_strided_slice %127 {offsets = [1, 0, 0], sizes = [1, 8, 32], strides = [1, 1, 1]} : vector<3x8x32xf32> to vector<1x8x32xf32>
    %142 = vector.shape_cast %141 : vector<1x8x32xf32> to vector<8x32xf32>
    %143 = arith.addf %142, %129 : vector<8x32xf32>
    %144 = arith.negf %143 : vector<8x32xf32>
    %145 = math.exp %144 : vector<8x32xf32>
    %cst_51 = arith.constant 1.000000e+00 : f32
    %146 = vector.broadcast %cst_51 : f32 to vector<8x32xf32>
    %147 = arith.addf %146, %145 : vector<8x32xf32>
    %148 = arith.divf %146, %147 : vector<8x32xf32>
    %149 = vector.extract_strided_slice %127 {offsets = [2, 0, 0], sizes = [1, 8, 32], strides = [1, 1, 1]} : vector<3x8x32xf32> to vector<1x8x32xf32>
    %150 = vector.shape_cast %149 : vector<1x8x32xf32> to vector<8x32xf32>
    %151 = arith.mulf %140, %132 : vector<8x32xf32>
    %152 = arith.addf %150, %151 : vector<8x32xf32>
    %153 = math.tanh %152 : vector<8x32xf32>
    %cst_52 = arith.constant 1.000000e+00 : f32
    %154 = vector.broadcast %cst_52 : f32 to vector<8x32xf32>
    %155 = arith.subf %154, %148 : vector<8x32xf32>
    %156 = arith.mulf %155, %153 : vector<8x32xf32>
    %157 = arith.mulf %148, %120 : vector<8x32xf32>
    %158 = arith.addf %156, %157 : vector<8x32xf32>
    %159 = arith.index_cast %c3_i32 : i32 to index
    %c0_53 = arith.constant 0 : index
    %c0_54 = arith.constant 0 : index
    %160 = vector.load %arg6[%159, %c0_53, %c0_54] : memref<8x8x32xf32, #tpu.memory_space<vmem>>, vector<1x8x32xf32>
    %161 = vector.shape_cast %160 : vector<1x8x32xf32> to vector<8x32xf32>
    %162 = vector.shape_cast %158 : vector<8x32xf32> to vector<1x8x32xf32>
    tpu.vector_store %arg6[%159, %c0_53, %c0_54], %162 {strides = array<i32>} : memref<8x8x32xf32, #tpu.memory_space<vmem>>, vector<1x8x32xf32>,
    %c4_i32 = arith.constant 4 : i32
    %163 = arith.index_cast %c4_i32 : i32 to index
    %c0_55 = arith.constant 0 : index
    %c0_56 = arith.constant 0 : index
    %c0_57 = arith.constant 0 : index
    %164 = vector.load %arg2[%163, %c0_55, %c0_56, %c0_57] : memref<8x3x8x32xf32, #tpu.memory_space<vmem>>, vector<1x3x8x32xf32>
    %165 = vector.shape_cast %164 : vector<1x3x8x32xf32> to vector<3x8x32xf32>
    %cst_58 = arith.constant dense<0.000000e+00> : vector<8x32xf32>
    %166 = tpu.matmul %158, %4, %cst_58 {dimension_numbers = #tpu.dot_dimension_numbers<[1], [0], [0], [1], [0, 0, 1, 1], [], []>} : vector<8x32xf32>, vector<32x32xf32>, vector<8x32xf32> -> vector<8x32xf32>
    %cst_59 = arith.constant dense<0.000000e+00> : vector<8x32xf32>
    %167 = tpu.matmul %158, %6, %cst_59 {dimension_numbers = #tpu.dot_dimension_numbers<[1], [0], [0], [1], [0, 0, 1, 1], [], []>} : vector<8x32xf32>, vector<32x32xf32>, vector<8x32xf32> -> vector<8x32xf32>
    %cst_60 = arith.constant dense<0.000000e+00> : vector<8x32xf32>
    %168 = tpu.matmul %158, %8, %cst_60 {dimension_numbers = #tpu.dot_dimension_numbers<[1], [0], [0], [1], [0, 0, 1, 1], [], []>} : vector<8x32xf32>, vector<32x32xf32>, vector<8x32xf32> -> vector<8x32xf32>
    %169 = vector.broadcast %9 : vector<1x32xf32> to vector<8x32xf32>
    %170 = arith.addf %168, %169 : vector<8x32xf32>
    %171 = vector.extract_strided_slice %165 {offsets = [0, 0, 0], sizes = [1, 8, 32], strides = [1, 1, 1]} : vector<3x8x32xf32> to vector<1x8x32xf32>
    %172 = vector.shape_cast %171 : vector<1x8x32xf32> to vector<8x32xf32>
    %173 = arith.addf %172, %166 : vector<8x32xf32>
    %174 = arith.negf %173 : vector<8x32xf32>
    %175 = math.exp %174 : vector<8x32xf32>
    %cst_61 = arith.constant 1.000000e+00 : f32
    %176 = vector.broadcast %cst_61 : f32 to vector<8x32xf32>
    %177 = arith.addf %176, %175 : vector<8x32xf32>
    %178 = arith.divf %176, %177 : vector<8x32xf32>
    %179 = vector.extract_strided_slice %165 {offsets = [1, 0, 0], sizes = [1, 8, 32], strides = [1, 1, 1]} : vector<3x8x32xf32> to vector<1x8x32xf32>
    %180 = vector.shape_cast %179 : vector<1x8x32xf32> to vector<8x32xf32>
    %181 = arith.addf %180, %167 : vector<8x32xf32>
    %182 = arith.negf %181 : vector<8x32xf32>
    %183 = math.exp %182 : vector<8x32xf32>
    %cst_62 = arith.constant 1.000000e+00 : f32
    %184 = vector.broadcast %cst_62 : f32 to vector<8x32xf32>
    %185 = arith.addf %184, %183 : vector<8x32xf32>
    %186 = arith.divf %184, %185 : vector<8x32xf32>
    %187 = vector.extract_strided_slice %165 {offsets = [2, 0, 0], sizes = [1, 8, 32], strides = [1, 1, 1]} : vector<3x8x32xf32> to vector<1x8x32xf32>
    %188 = vector.shape_cast %187 : vector<1x8x32xf32> to vector<8x32xf32>
    %189 = arith.mulf %178, %170 : vector<8x32xf32>
    %190 = arith.addf %188, %189 : vector<8x32xf32>
    %191 = math.tanh %190 : vector<8x32xf32>
    %cst_63 = arith.constant 1.000000e+00 : f32
    %192 = vector.broadcast %cst_63 : f32 to vector<8x32xf32>
    %193 = arith.subf %192, %186 : vector<8x32xf32>
    %194 = arith.mulf %193, %191 : vector<8x32xf32>
    %195 = arith.mulf %186, %158 : vector<8x32xf32>
    %196 = arith.addf %194, %195 : vector<8x32xf32>
    %197 = arith.index_cast %c4_i32 : i32 to index
    %c0_64 = arith.constant 0 : index
    %c0_65 = arith.constant 0 : index
    %198 = vector.load %arg6[%197, %c0_64, %c0_65] : memref<8x8x32xf32, #tpu.memory_space<vmem>>, vector<1x8x32xf32>
    %199 = vector.shape_cast %198 : vector<1x8x32xf32> to vector<8x32xf32>
    %200 = vector.shape_cast %196 : vector<8x32xf32> to vector<1x8x32xf32>
    tpu.vector_store %arg6[%197, %c0_64, %c0_65], %200 {strides = array<i32>} : memref<8x8x32xf32, #tpu.memory_space<vmem>>, vector<1x8x32xf32>,
    %c5_i32 = arith.constant 5 : i32
    %201 = arith.index_cast %c5_i32 : i32 to index
    %c0_66 = arith.constant 0 : index
    %c0_67 = arith.constant 0 : index
    %c0_68 = arith.constant 0 : index
    %202 = vector.load %arg2[%201, %c0_66, %c0_67, %c0_68] : memref<8x3x8x32xf32, #tpu.memory_space<vmem>>, vector<1x3x8x32xf32>
    %203 = vector.shape_cast %202 : vector<1x3x8x32xf32> to vector<3x8x32xf32>
    %cst_69 = arith.constant dense<0.000000e+00> : vector<8x32xf32>
    %204 = tpu.matmul %196, %4, %cst_69 {dimension_numbers = #tpu.dot_dimension_numbers<[1], [0], [0], [1], [0, 0, 1, 1], [], []>} : vector<8x32xf32>, vector<32x32xf32>, vector<8x32xf32> -> vector<8x32xf32>
    %cst_70 = arith.constant dense<0.000000e+00> : vector<8x32xf32>
    %205 = tpu.matmul %196, %6, %cst_70 {dimension_numbers = #tpu.dot_dimension_numbers<[1], [0], [0], [1], [0, 0, 1, 1], [], []>} : vector<8x32xf32>, vector<32x32xf32>, vector<8x32xf32> -> vector<8x32xf32>
    %cst_71 = arith.constant dense<0.000000e+00> : vector<8x32xf32>
    %206 = tpu.matmul %196, %8, %cst_71 {dimension_numbers = #tpu.dot_dimension_numbers<[1], [0], [0], [1], [0, 0, 1, 1], [], []>} : vector<8x32xf32>, vector<32x32xf32>, vector<8x32xf32> -> vector<8x32xf32>
    %207 = vector.broadcast %9 : vector<1x32xf32> to vector<8x32xf32>
    %208 = arith.addf %206, %207 : vector<8x32xf32>
    %209 = vector.extract_strided_slice %203 {offsets = [0, 0, 0], sizes = [1, 8, 32], strides = [1, 1, 1]} : vector<3x8x32xf32> to vector<1x8x32xf32>
    %210 = vector.shape_cast %209 : vector<1x8x32xf32> to vector<8x32xf32>
    %211 = arith.addf %210, %204 : vector<8x32xf32>
    %212 = arith.negf %211 : vector<8x32xf32>
    %213 = math.exp %212 : vector<8x32xf32>
    %cst_72 = arith.constant 1.000000e+00 : f32
    %214 = vector.broadcast %cst_72 : f32 to vector<8x32xf32>
    %215 = arith.addf %214, %213 : vector<8x32xf32>
    %216 = arith.divf %214, %215 : vector<8x32xf32>
    %217 = vector.extract_strided_slice %203 {offsets = [1, 0, 0], sizes = [1, 8, 32], strides = [1, 1, 1]} : vector<3x8x32xf32> to vector<1x8x32xf32>
    %218 = vector.shape_cast %217 : vector<1x8x32xf32> to vector<8x32xf32>
    %219 = arith.addf %218, %205 : vector<8x32xf32>
    %220 = arith.negf %219 : vector<8x32xf32>
    %221 = math.exp %220 : vector<8x32xf32>
    %cst_73 = arith.constant 1.000000e+00 : f32
    %222 = vector.broadcast %cst_73 : f32 to vector<8x32xf32>
    %223 = arith.addf %222, %221 : vector<8x32xf32>
    %224 = arith.divf %222, %223 : vector<8x32xf32>
    %225 = vector.extract_strided_slice %203 {offsets = [2, 0, 0], sizes = [1, 8, 32], strides = [1, 1, 1]} : vector<3x8x32xf32> to vector<1x8x32xf32>
    %226 = vector.shape_cast %225 : vector<1x8x32xf32> to vector<8x32xf32>
    %227 = arith.mulf %216, %208 : vector<8x32xf32>
    %228 = arith.addf %226, %227 : vector<8x32xf32>
    %229 = math.tanh %228 : vector<8x32xf32>
    %cst_74 = arith.constant 1.000000e+00 : f32
    %230 = vector.broadcast %cst_74 : f32 to vector<8x32xf32>
    %231 = arith.subf %230, %224 : vector<8x32xf32>
    %232 = arith.mulf %231, %229 : vector<8x32xf32>
    %233 = arith.mulf %224, %196 : vector<8x32xf32>
    %234 = arith.addf %232, %233 : vector<8x32xf32>
    %235 = arith.index_cast %c5_i32 : i32 to index
    %c0_75 = arith.constant 0 : index
    %c0_76 = arith.constant 0 : index
    %236 = vector.load %arg6[%235, %c0_75, %c0_76] : memref<8x8x32xf32, #tpu.memory_space<vmem>>, vector<1x8x32xf32>
    %237 = vector.shape_cast %236 : vector<1x8x32xf32> to vector<8x32xf32>
    %238 = vector.shape_cast %234 : vector<8x32xf32> to vector<1x8x32xf32>
    tpu.vector_store %arg6[%235, %c0_75, %c0_76], %238 {strides = array<i32>} : memref<8x8x32xf32, #tpu.memory_space<vmem>>, vector<1x8x32xf32>,
    %c6_i32 = arith.constant 6 : i32
    %239 = arith.index_cast %c6_i32 : i32 to index
    %c0_77 = arith.constant 0 : index
    %c0_78 = arith.constant 0 : index
    %c0_79 = arith.constant 0 : index
    %240 = vector.load %arg2[%239, %c0_77, %c0_78, %c0_79] : memref<8x3x8x32xf32, #tpu.memory_space<vmem>>, vector<1x3x8x32xf32>
    %241 = vector.shape_cast %240 : vector<1x3x8x32xf32> to vector<3x8x32xf32>
    %cst_80 = arith.constant dense<0.000000e+00> : vector<8x32xf32>
    %242 = tpu.matmul %234, %4, %cst_80 {dimension_numbers = #tpu.dot_dimension_numbers<[1], [0], [0], [1], [0, 0, 1, 1], [], []>} : vector<8x32xf32>, vector<32x32xf32>, vector<8x32xf32> -> vector<8x32xf32>
    %cst_81 = arith.constant dense<0.000000e+00> : vector<8x32xf32>
    %243 = tpu.matmul %234, %6, %cst_81 {dimension_numbers = #tpu.dot_dimension_numbers<[1], [0], [0], [1], [0, 0, 1, 1], [], []>} : vector<8x32xf32>, vector<32x32xf32>, vector<8x32xf32> -> vector<8x32xf32>
    %cst_82 = arith.constant dense<0.000000e+00> : vector<8x32xf32>
    %244 = tpu.matmul %234, %8, %cst_82 {dimension_numbers = #tpu.dot_dimension_numbers<[1], [0], [0], [1], [0, 0, 1, 1], [], []>} : vector<8x32xf32>, vector<32x32xf32>, vector<8x32xf32> -> vector<8x32xf32>
    %245 = vector.broadcast %9 : vector<1x32xf32> to vector<8x32xf32>
    %246 = arith.addf %244, %245 : vector<8x32xf32>
    %247 = vector.extract_strided_slice %241 {offsets = [0, 0, 0], sizes = [1, 8, 32], strides = [1, 1, 1]} : vector<3x8x32xf32> to vector<1x8x32xf32>
    %248 = vector.shape_cast %247 : vector<1x8x32xf32> to vector<8x32xf32>
    %249 = arith.addf %248, %242 : vector<8x32xf32>
    %250 = arith.negf %249 : vector<8x32xf32>
    %251 = math.exp %250 : vector<8x32xf32>
    %cst_83 = arith.constant 1.000000e+00 : f32
    %252 = vector.broadcast %cst_83 : f32 to vector<8x32xf32>
    %253 = arith.addf %252, %251 : vector<8x32xf32>
    %254 = arith.divf %252, %253 : vector<8x32xf32>
    %255 = vector.extract_strided_slice %241 {offsets = [1, 0, 0], sizes = [1, 8, 32], strides = [1, 1, 1]} : vector<3x8x32xf32> to vector<1x8x32xf32>
    %256 = vector.shape_cast %255 : vector<1x8x32xf32> to vector<8x32xf32>
    %257 = arith.addf %256, %243 : vector<8x32xf32>
    %258 = arith.negf %257 : vector<8x32xf32>
    %259 = math.exp %258 : vector<8x32xf32>
    %cst_84 = arith.constant 1.000000e+00 : f32
    %260 = vector.broadcast %cst_84 : f32 to vector<8x32xf32>
    %261 = arith.addf %260, %259 : vector<8x32xf32>
    %262 = arith.divf %260, %261 : vector<8x32xf32>
    %263 = vector.extract_strided_slice %241 {offsets = [2, 0, 0], sizes = [1, 8, 32], strides = [1, 1, 1]} : vector<3x8x32xf32> to vector<1x8x32xf32>
    %264 = vector.shape_cast %263 : vector<1x8x32xf32> to vector<8x32xf32>
    %265 = arith.mulf %254, %246 : vector<8x32xf32>
    %266 = arith.addf %264, %265 : vector<8x32xf32>
    %267 = math.tanh %266 : vector<8x32xf32>
    %cst_85 = arith.constant 1.000000e+00 : f32
    %268 = vector.broadcast %cst_85 : f32 to vector<8x32xf32>
    %269 = arith.subf %268, %262 : vector<8x32xf32>
    %270 = arith.mulf %269, %267 : vector<8x32xf32>
    %271 = arith.mulf %262, %234 : vector<8x32xf32>
    %272 = arith.addf %270, %271 : vector<8x32xf32>
    %273 = arith.index_cast %c6_i32 : i32 to index
    %c0_86 = arith.constant 0 : index
    %c0_87 = arith.constant 0 : index
    %274 = vector.load %arg6[%273, %c0_86, %c0_87] : memref<8x8x32xf32, #tpu.memory_space<vmem>>, vector<1x8x32xf32>
    %275 = vector.shape_cast %274 : vector<1x8x32xf32> to vector<8x32xf32>
    %276 = vector.shape_cast %272 : vector<8x32xf32> to vector<1x8x32xf32>
    tpu.vector_store %arg6[%273, %c0_86, %c0_87], %276 {strides = array<i32>} : memref<8x8x32xf32, #tpu.memory_space<vmem>>, vector<1x8x32xf32>,
    %c7_i32 = arith.constant 7 : i32
    %277 = arith.index_cast %c7_i32 : i32 to index
    %c0_88 = arith.constant 0 : index
    %c0_89 = arith.constant 0 : index
    %c0_90 = arith.constant 0 : index
    %278 = vector.load %arg2[%277, %c0_88, %c0_89, %c0_90] : memref<8x3x8x32xf32, #tpu.memory_space<vmem>>, vector<1x3x8x32xf32>
    %279 = vector.shape_cast %278 : vector<1x3x8x32xf32> to vector<3x8x32xf32>
    %cst_91 = arith.constant dense<0.000000e+00> : vector<8x32xf32>
    %280 = tpu.matmul %272, %4, %cst_91 {dimension_numbers = #tpu.dot_dimension_numbers<[1], [0], [0], [1], [0, 0, 1, 1], [], []>} : vector<8x32xf32>, vector<32x32xf32>, vector<8x32xf32> -> vector<8x32xf32>
    %cst_92 = arith.constant dense<0.000000e+00> : vector<8x32xf32>
    %281 = tpu.matmul %272, %6, %cst_92 {dimension_numbers = #tpu.dot_dimension_numbers<[1], [0], [0], [1], [0, 0, 1, 1], [], []>} : vector<8x32xf32>, vector<32x32xf32>, vector<8x32xf32> -> vector<8x32xf32>
    %cst_93 = arith.constant dense<0.000000e+00> : vector<8x32xf32>
    %282 = tpu.matmul %272, %8, %cst_93 {dimension_numbers = #tpu.dot_dimension_numbers<[1], [0], [0], [1], [0, 0, 1, 1], [], []>} : vector<8x32xf32>, vector<32x32xf32>, vector<8x32xf32> -> vector<8x32xf32>
    %283 = vector.broadcast %9 : vector<1x32xf32> to vector<8x32xf32>
    %284 = arith.addf %282, %283 : vector<8x32xf32>
    %285 = vector.extract_strided_slice %279 {offsets = [0, 0, 0], sizes = [1, 8, 32], strides = [1, 1, 1]} : vector<3x8x32xf32> to vector<1x8x32xf32>
    %286 = vector.shape_cast %285 : vector<1x8x32xf32> to vector<8x32xf32>
    %287 = arith.addf %286, %280 : vector<8x32xf32>
    %288 = arith.negf %287 : vector<8x32xf32>
    %289 = math.exp %288 : vector<8x32xf32>
    %cst_94 = arith.constant 1.000000e+00 : f32
    %290 = vector.broadcast %cst_94 : f32 to vector<8x32xf32>
    %291 = arith.addf %290, %289 : vector<8x32xf32>
    %292 = arith.divf %290, %291 : vector<8x32xf32>
    %293 = vector.extract_strided_slice %279 {offsets = [1, 0, 0], sizes = [1, 8, 32], strides = [1, 1, 1]} : vector<3x8x32xf32> to vector<1x8x32xf32>
    %294 = vector.shape_cast %293 : vector<1x8x32xf32> to vector<8x32xf32>
    %295 = arith.addf %294, %281 : vector<8x32xf32>
    %296 = arith.negf %295 : vector<8x32xf32>
    %297 = math.exp %296 : vector<8x32xf32>
    %cst_95 = arith.constant 1.000000e+00 : f32
    %298 = vector.broadcast %cst_95 : f32 to vector<8x32xf32>
    %299 = arith.addf %298, %297 : vector<8x32xf32>
    %300 = arith.divf %298, %299 : vector<8x32xf32>
    %301 = vector.extract_strided_slice %279 {offsets = [2, 0, 0], sizes = [1, 8, 32], strides = [1, 1, 1]} : vector<3x8x32xf32> to vector<1x8x32xf32>
    %302 = vector.shape_cast %301 : vector<1x8x32xf32> to vector<8x32xf32>
    %303 = arith.mulf %292, %284 : vector<8x32xf32>
    %304 = arith.addf %302, %303 : vector<8x32xf32>
    %305 = math.tanh %304 : vector<8x32xf32>
    %cst_96 = arith.constant 1.000000e+00 : f32
    %306 = vector.broadcast %cst_96 : f32 to vector<8x32xf32>
    %307 = arith.subf %306, %300 : vector<8x32xf32>
    %308 = arith.mulf %307, %305 : vector<8x32xf32>
    %309 = arith.mulf %300, %272 : vector<8x32xf32>
    %310 = arith.addf %308, %309 : vector<8x32xf32>
    %311 = arith.index_cast %c7_i32 : i32 to index
    %c0_97 = arith.constant 0 : index
    %c0_98 = arith.constant 0 : index
    %312 = vector.load %arg6[%311, %c0_97, %c0_98] : memref<8x8x32xf32, #tpu.memory_space<vmem>>, vector<1x8x32xf32>
    %313 = vector.shape_cast %312 : vector<1x8x32xf32> to vector<8x32xf32>
    %314 = vector.shape_cast %310 : vector<8x32xf32> to vector<1x8x32xf32>
    tpu.vector_store %arg6[%311, %c0_97, %c0_98], %314 {strides = array<i32>} : memref<8x8x32xf32, #tpu.memory_space<vmem>>, vector<1x8x32xf32>,
    %c8_i32 = arith.constant 8 : i32
    %c0_99 = arith.constant 0 : index
    %c0_100 = arith.constant 0 : index
    %315 = vector.load %arg8[%c0_99, %c0_100] : memref<8x32xf32, #tpu.memory_space<vmem>>, vector<8x32xf32>
    tpu.vector_store %arg8[%c0_99, %c0_100], %310 {strides = array<i32>} : memref<8x32xf32, #tpu.memory_space<vmem>>, vector<8x32xf32>,
    %c0_i32_101 = arith.constant 0 : i32
    %316 = arith.cmpi eq, %arg1, %c0_i32_101 : i32
    %317 = arith.extui %316 : i1 to i32
    %c0_i32_102 = arith.constant 0 : i32
    %318 = arith.cmpi ne, %317, %c0_i32_102 : i32
    scf.if %318 {
      %c0_103 = arith.constant 0 : index
      %c0_104 = arith.constant 0 : index
      %319 = vector.load %arg7[%c0_103, %c0_104] : memref<8x32xf32, #tpu.memory_space<vmem>>, vector<8x32xf32>
      tpu.vector_store %arg7[%c0_103, %c0_104], %310 {strides = array<i32>} : memref<8x32xf32, #tpu.memory_space<vmem>>, vector<8x32xf32>,
    } else {
    }
    return
  }
  func.func @transform_0(%arg0: i32, %arg1: i32) -> (i32, i32, i32, i32) {
    %c0_i32 = arith.constant 0 : i32
    %c0_i32_0 = arith.constant 0 : i32
    %c0_i32_1 = arith.constant 0 : i32
    return %arg1, %c0_i32, %arg0, %c0_i32_0 : i32, i32, i32, i32
  }
  func.func @transform_1(%arg0: i32, %arg1: i32) -> (i32, i32) {
    %c0_i32 = arith.constant 0 : i32
    %c0_i32_0 = arith.constant 0 : i32
    return %arg0, %c0_i32 : i32, i32
  }
  func.func @transform_2(%arg0: i32, %arg1: i32) -> (i32, i32, i32) {
    %c0_i32 = arith.constant 0 : i32
    %c0_i32_0 = arith.constant 0 : i32
    %c0_i32_1 = arith.constant 0 : i32
    %c0_i32_2 = arith.constant 0 : i32
    return %c0_i32, %c0_i32_0, %c0_i32_1 : i32, i32, i32
  }
  func.func @transform_3(%arg0: i32, %arg1: i32) -> (i32, i32) {
    %c0_i32 = arith.constant 0 : i32
    %c0_i32_0 = arith.constant 0 : i32
    %c0_i32_1 = arith.constant 0 : i32
    return %c0_i32, %c0_i32_0 : i32, i32
  }
  func.func @transform_4(%arg0: i32, %arg1: i32) -> (i32, i32, i32) {
    %c0_i32 = arith.constant 0 : i32
    %c0_i32_0 = arith.constant 0 : i32
    return %arg1, %arg0, %c0_i32 : i32, i32, i32
  }
  func.func @transform_5(%arg0: i32, %arg1: i32) -> (i32, i32) {
    %c0_i32 = arith.constant 0 : i32
    %c0_i32_0 = arith.constant 0 : i32
    return %arg0, %c0_i32 : i32, i32
  }
}

</mosaic_0001>

<llo_original>
// kernel: tpu_custom_call.1
$region0: #{tpu_custom_call.1}
  #allocation0 [shape = 'u32[]', space=smem, size = 0x4, offset = 0x4, fixed_abs, tag = 'smem constant byte address 0x4 - core index']
  #allocation1 [shape = 'u32[72,128]{1,0:T(1,128)}', space=vmem, size = 0x9000, scoped, tag = 'internal scratch']
  #allocation2 [shape = 'f32[8,32]{1,0:T(8,128)}', space=vmem, size = 0x1000, scoped, tag = 'scratch operand']
  %s0 = inlined_call_operand.hbm [shape: f32[8,3,8,32], index: 0, kind: input, shape index: {}]
  %s1 = inlined_call_operand.hbm [shape: f32[8,32], index: 1, kind: input, shape index: {}]
  %s2 = inlined_call_operand.hbm [shape: f32[3,32,32], index: 2, kind: input, shape index: {}]
  %s3 = inlined_call_operand.vmem [shape: f32[1,32], index: 3, kind: input, shape index: {}]
  %s4 = inlined_call_operand.hbm [shape: f32[8,8,32], index: 4, kind: output, shape index: {0}]
  %s5 = inlined_call_operand.hbm [shape: f32[8,32], index: 5, kind: output, shape index: {1}]
  %6 = xla_tuple %s4, %s5
  %s7 = sld [smem:[#allocation0]]
  $region54: #{tpu_custom_call.1} parent=0
    _
  %s9 = ssub.s32 1, %s7
  %s10 = scalar_select 0, %s9, %s7
  $region1: #{tpu_custom_call.1} parent=0
    #allocation3 [shape = 'u8[98304]{0}', space=vmem, size = 0x18000, scoped, tag = 'input window, operand 0, single buffered']
    #allocation4 [shape = 's32[1]{0}', space=sflag, size = 0x4, scoped, tag = 'scoped memory for tpu_custom_call.1']
    #allocation5 [shape = 's32[1]{0}', space=sflag, size = 0x4, scoped, tag = 'scoped memory for tpu_custom_call.1']
    #allocation6 [shape = 'u8[4096]{0}', space=vmem, size = 0x1000, scoped, tag = 'input window, operand 1, single buffered']
    #allocation7 [shape = 's32[1]{0}', space=sflag, size = 0x4, scoped, tag = 'scoped memory for tpu_custom_call.1']
    #allocation8 [shape = 'u8[49152]{0}', space=vmem, size = 0xc000, scoped, tag = 'input window, operand 2, single buffered']
    #allocation9 [shape = 'u8[32768]{0}', space=vmem, size = 0x8000, scoped, tag = 'output window, operand 0, single buffered']
    #allocation10 [shape = 'u8[4096]{0}', space=vmem, size = 0x1000, scoped, tag = 'output window, operand 1, single buffered']
    #allocation11 [shape = 's32[1]{0}', space=sflag, size = 0x4, scoped, tag = 'scoped memory for tpu_custom_call.1']
    %11 = vsyncpa [#allocation4], 0
    %12 = vsyncpa [#allocation7], 0
    %13 = vsyncpa [#allocation5], 0
    %14 = vsyncpa [#allocation11], 0
    // Predicated region
    $region2: #{tpu_custom_call.1} parent=1 // pred_check
      _
    $region3: #{tpu_custom_call.1} parent=1 // pred_check_branch
      %16 = sbr.rel (0) target = $region5
    $region4: #{tpu_custom_call.1} parent=1 // pred_region
      %18 = vsyncadd [#allocation4], 0
      %s19 = sshll.u32 %s0, 4
      %s20 = int_to_ptr.hbm [resolvable:$true] %s19
      %s21 = sshll.u32 [#allocation3], 4
      %s22 = int_to_ptr.vmem [resolvable:$true] %s21
      %27 = dma.hbm_to_vmem [thread:$0]  %s20, 3072, %s22, [#allocation4], 128, 128, 8
    $region5: #{tpu_custom_call.1} parent=1 // pred_fallthru
      _
    // Predicated region
    $region6: #{tpu_custom_call.1} parent=1 // pred_check
      _
    $region7: #{tpu_custom_call.1} parent=1 // pred_check_branch
      %29 = sbr.rel (0) target = $region9
    $region8: #{tpu_custom_call.1} parent=1 // pred_region
      %31 = vsyncadd [#allocation7], 0
      %s33 = sshll.u32 %s1, 4
      %s34 = int_to_ptr.hbm [resolvable:$true] %s33
      %s35 = sshll.u32 [#allocation6], 4
      %s36 = int_to_ptr.vmem [resolvable:$true] %s35
      %38 = dma.hbm_to_vmem [thread:$0]  %s34, 128, %s36, [#allocation7]
    $region9: #{tpu_custom_call.1} parent=1 // pred_fallthru
      _
    // Predicated region
    $region10: #{tpu_custom_call.1} parent=1 // pred_check
      _
    $region11: #{tpu_custom_call.1} parent=1 // pred_check_branch
      %40 = sbr.rel (0) target = $region13
    $region12: #{tpu_custom_call.1} parent=1 // pred_region
      %42 = vsyncadd [#allocation7], 0
      %s43 = sshll.u32 %s2, 4
      %s44 = int_to_ptr.hbm [resolvable:$true] %s43
      %s45 = sshll.u32 [#allocation8], 4
      %s46 = int_to_ptr.vmem [resolvable:$true] %s45
      %51 = dma.hbm_to_vmem [thread:$0]  %s44, 1536, %s46, [#allocation7], 128, 128, 8
    $region13: #{tpu_custom_call.1} parent=1 // pred_fallthru
      _
    // Predicated region
    $region14: #{tpu_custom_call.1} parent=1 // pred_check
      _
    $region15: #{tpu_custom_call.1} parent=1 // pred_check_branch
      %53 = sbr.rel (0) target = $region17
    $region16: #{tpu_custom_call.1} parent=1 // pred_region
      _
    $region17: #{tpu_custom_call.1} parent=1 // pred_fallthru
      _
    // Predicated region
    $region18: #{tpu_custom_call.1} parent=1 // pred_check
      _
    $region19: #{tpu_custom_call.1} parent=1 // pred_check_branch
      %55 = sbr.rel (0) target = $region21
    $region20: #{tpu_custom_call.1} parent=1 // pred_region
      %57 = dma.done [#allocation4], 3072
    $region21: #{tpu_custom_call.1} parent=1 // pred_fallthru
      _
    // Predicated region
    $region22: #{tpu_custom_call.1} parent=1 // pred_check
      _
    $region23: #{tpu_custom_call.1} parent=1 // pred_check_branch
      %59 = sbr.rel (0) target = $region25
    $region24: #{tpu_custom_call.1} parent=1 // pred_region
      %61 = dma.done [#allocation7], 128
    $region25: #{tpu_custom_call.1} parent=1 // pred_fallthru
      _
    // Predicated region
    $region26: #{tpu_custom_call.1} parent=1 // pred_check
      _
    $region27: #{tpu_custom_call.1} parent=1 // pred_check_branch
      %63 = sbr.rel (0) target = $region29
    $region28: #{tpu_custom_call.1} parent=1 // pred_region
      %65 = dma.done [#allocation7], 1536
    $region29: #{tpu_custom_call.1} parent=1 // pred_fallthru
      _
    %p66 = scmp.eq.s32.totalorder 0, 0
    // Predicated region
    $region30: #{tpu_custom_call.1} parent=1 // pred_check
      %p67 = pneg %p66
    $region31: #{tpu_custom_call.1} parent=1 // pred_check_branch
      %69 = sbr.rel (%p67) target = $region33
    $region32: #{tpu_custom_call.1} parent=1 // pred_region
      %v70 = vld [vmem:[#allocation6] sm:$0xff]
      %vm71 = vcmask 261120
      %72 = vst.msk [vmem:[#allocation2] sm:$0xff] %vm71, %v70
    $region33: #{tpu_custom_call.1} parent=1 // pred_fallthru
      _
    %v73 = vld [vmem:[#allocation8] sm:$0xff]
    %v74 = vld [vmem:[#allocation8 + $0x8] sm:$0xff]
    %v75 = vld [vmem:[#allocation8 + $0x10] sm:$0xff]
    %v76 = vld [vmem:[#allocation8 + $0x18] sm:$0xff]
    %s77 = scalar_lea.vmem [#allocation8], 32
    %v78 = vld [vmem:[%s77] sm:$0xff]
    %v79 = vld [vmem:[%s77 + $0x8] sm:$0xff]
    %v80 = vld [vmem:[%s77 + $0x10] sm:$0xff]
    %v81 = vld [vmem:[%s77 + $0x18] sm:$0xff]
    %s82 = scalar_lea.vmem [#allocation8], 64
    %v83 = vld [vmem:[%s82] sm:$0xff]
    %v84 = vld [vmem:[%s82 + $0x8] sm:$0xff]
    %v85 = vld [vmem:[%s82 + $0x10] sm:$0xff]
    %v86 = vld [vmem:[%s82 + $0x18] sm:$0xff]
    %v87 = vld [vmem:[%s3] sm:$0x1]
    %v88 = vld [vmem:[#allocation2] sm:$0xff]
    %v89 = vld [vmem:[#allocation3] sm:$0xff]
    %v90 = vld [vmem:[#allocation3 + $0x8] sm:$0xff]
    %v91 = vld [vmem:[#allocation3 + $0x10] sm:$0xff]
    %vm92 = vcmask 261120
    %v94 = vsel %vm92, %v88, 0
    %96 = vmatpush.msra.mxu0 0.0
    %97 = vmatpush.msra.mxu0 0.0
    %98 = vmatpush.msra.mxu0 0.0
    %99 = vmatpush.msra.mxu0 0.0
    %100 = vmatpush.msra.mxu0 0.0
    %101 = vmatpush.msra.mxu0 0.0
    %102 = vmatpush.msra.mxu0 0.0
    %103 = vmatpush.msra.mxu0 0.0
    %104 = vmatpush.msra.mxu0 0.0
    %105 = vmatpush.msra.mxu0 0.0
    %106 = vmatpush.msra.mxu0 0.0
    %107 = vmatpush.msra.mxu0 0.0
    %108 = vmatpush.msra.mxu0 %v76
    %109 = vmatpush.msra.mxu0 %v75
    %110 = vmatpush.msra.mxu0 %v74
    %111 = vmatpush.msra.mxu0 %v73
    %112 = vmatmul.f32.gmra.mxu0 %v94
    %v113 = vpop.f32.mrf.mxu0
    %v114 = vadd.f32 0.0, %v113
    %115 = vdwg.mxu0
    %116 = vmatpush.msra.mxu0 0.0
    %117 = vmatpush.msra.mxu0 0.0
    %118 = vmatpush.msra.mxu0 0.0
    %119 = vmatpush.msra.mxu0 0.0
    %120 = vmatpush.msra.mxu0 0.0
    %121 = vmatpush.msra.mxu0 0.0
    %122 = vmatpush.msra.mxu0 0.0
    %123 = vmatpush.msra.mxu0 0.0
    %124 = vmatpush.msra.mxu0 0.0
    %125 = vmatpush.msra.mxu0 0.0
    %126 = vmatpush.msra.mxu0 0.0
    %127 = vmatpush.msra.mxu0 0.0
    %128 = vmatpush.msra.mxu0 %v81
    %129 = vmatpush.msra.mxu0 %v80
    %130 = vmatpush.msra.mxu0 %v79
    %131 = vmatpush.msra.mxu0 %v78
    %132 = vmatmul.f32.gmra.mxu0 %v94
    %v133 = vpop.f32.mrf.mxu0
    %v134 = vadd.f32 0.0, %v133
    %135 = vdwg.mxu0
    %v137 = vperm.slane %v87, 0
    %139 = vmatpush.msra.mxu0 0.0
    %140 = vmatpush.msra.mxu0 0.0
    %141 = vmatpush.msra.mxu0 0.0
    %142 = vmatpush.msra.mxu0 0.0
    %143 = vmatpush.msra.mxu0 0.0
    %144 = vmatpush.msra.mxu0 0.0
    %145 = vmatpush.msra.mxu0 0.0
    %146 = vmatpush.msra.mxu0 0.0
    %147 = vmatpush.msra.mxu0 0.0
    %148 = vmatpush.msra.mxu0 0.0
    %149 = vmatpush.msra.mxu0 0.0
    %150 = vmatpush.msra.mxu0 0.0
    %151 = vmatpush.msra.mxu0 %v86
    %152 = vmatpush.msra.mxu0 %v85
    %153 = vmatpush.msra.mxu0 %v84
    %154 = vmatpush.msra.mxu0 %v83
    %155 = vmatmul.f32.gmra.mxu0 %v94
    %v156 = vpop.f32.mrf.mxu0
    %v157 = vadd.f32 %v137, %v156
    %158 = vdwg.mxu0
    %v159 = vadd.f32 %v89, %v114
    %v160 = vxor.u32 %v159, 2147483648
    %v161 = vmul.f32 %v160, 1.442695
    %v162 = vpow.pop %v161
    %v163 = vadd.f32 %v162, 1.0
    %v164 = vrcp.pop %v163
    %v165 = vmul.f32 %v163, %v164
    %v166 = vsub.f32 1.0, %v165
    %v167 = vmul.f32 %v164, %v166
    %v168 = vadd.f32 %v164, %v167
    %vm169 = vweird.f32 %v163
    %vm170 = vweird.f32 %v164
    %vm171 = vmor %vm169, %vm170
    %v172 = vsel %vm171, %v164, %v168
    %v173 = vand.u32 2147483647, %v163
    %vm174 = vcmp.eq.f32.partialorder %v173, 8.507059e+37
    %v175 = vand.u32 %v163, 2147483648
    %v176 = vor.u32 1.1754944e-38, %v175
    %v177 = vsel %vm174, %v176, %v172
    %v178 = vmul.f32 1.0, %v177
    %v179 = vadd.f32 %v90, %v134
    %v180 = vxor.u32 %v179, 2147483648
    %v181 = vmul.f32 %v180, 1.442695
    %v182 = vpow.pop %v181
    %v183 = vadd.f32 %v182, 1.0
    %v184 = vrcp.pop %v183
    %v185 = vmul.f32 %v183, %v184
    %v186 = vsub.f32 1.0, %v185
    %v187 = vmul.f32 %v184, %v186
    %v188 = vadd.f32 %v184, %v187
    %vm189 = vweird.f32 %v183
    %vm190 = vweird.f32 %v184
    %vm191 = vmor %vm189, %vm190
    %v192 = vsel %vm191, %v184, %v188
    %v193 = vand.u32 2147483647, %v183
    %vm194 = vcmp.eq.f32.partialorder %v193, 8.507059e+37
    %v195 = vand.u32 %v183, 2147483648
    %v196 = vor.u32 1.1754944e-38, %v195
    %v197 = vsel %vm194, %v196, %v192
    %v198 = vmul.f32 1.0, %v197
    %v199 = vmul.f32 %v178, %v157
    %v200 = vadd.f32 %v91, %v199
    %v201 = vtanh.pop %v200
    %v202 = vsub.f32 1.0, %v198
    %v203 = vmul.f32 %v202, %v201
    %v204 = vmul.f32 %v198, %v88
    %v205 = vadd.f32 %v203, %v204
    %206 = vst.msk [vmem:[#allocation9] sm:$0xff] %vm92, %v205
    %s207 = scalar_lea.vmem [#allocation3], 24
    %v208 = vld [vmem:[%s207] sm:$0xff]
    %v209 = vld [vmem:[%s207 + $0x8] sm:$0xff]
    %v210 = vld [vmem:[%s207 + $0x10] sm:$0xff]
    %v212 = vsel %vm92, %v205, 0
    %214 = vmatpush.msra.mxu0 0.0
    %215 = vmatpush.msra.mxu0 0.0
    %216 = vmatpush.msra.mxu0 0.0
    %217 = vmatpush.msra.mxu0 0.0
    %218 = vmatpush.msra.mxu0 0.0
    %219 = vmatpush.msra.mxu0 0.0
    %220 = vmatpush.msra.mxu0 0.0
    %221 = vmatpush.msra.mxu0 0.0
    %222 = vmatpush.msra.mxu0 0.0
    %223 = vmatpush.msra.mxu0 0.0
    %224 = vmatpush.msra.mxu0 0.0
    %225 = vmatpush.msra.mxu0 0.0
    %226 = vmatpush.msra.mxu0 %v76
    %227 = vmatpush.msra.mxu0 %v75
    %228 = vmatpush.msra.mxu0 %v74
    %229 = vmatpush.msra.mxu0 %v73
    %230 = vmatmul.f32.gmra.mxu0 %v212
    %v231 = vpop.f32.mrf.mxu0
    %v232 = vadd.f32 0.0, %v231
    %233 = vdwg.mxu0
    %234 = vmatpush.msra.mxu0 0.0
    %235 = vmatpush.msra.mxu0 0.0
    %236 = vmatpush.msra.mxu0 0.0
    %237 = vmatpush.msra.mxu0 0.0
    %238 = vmatpush.msra.mxu0 0.0
    %239 = vmatpush.msra.mxu0 0.0
    %240 = vmatpush.msra.mxu0 0.0
    %241 = vmatpush.msra.mxu0 0.0
    %242 = vmatpush.msra.mxu0 0.0
    %243 = vmatpush.msra.mxu0 0.0
    %244 = vmatpush.msra.mxu0 0.0
    %245 = vmatpush.msra.mxu0 0.0
    %246 = vmatpush.msra.mxu0 %v81
    %247 = vmatpush.msra.mxu0 %v80
    %248 = vmatpush.msra.mxu0 %v79
    %249 = vmatpush.msra.mxu0 %v78
    %250 = vmatmul.f32.gmra.mxu0 %v212
    %v251 = vpop.f32.mrf.mxu0
    %v252 = vadd.f32 0.0, %v251
    %253 = vdwg.mxu0
    %254 = vmatpush.msra.mxu0 0.0
    %255 = vmatpush.msra.mxu0 0.0
    %256 = vmatpush.msra.mxu0 0.0
    %257 = vmatpush.msra.mxu0 0.0
    %258 = vmatpush.msra.mxu0 0.0
    %259 = vmatpush.msra.mxu0 0.0
    %260 = vmatpush.msra.mxu0 0.0
    %261 = vmatpush.msra.mxu0 0.0
    %262 = vmatpush.msra.mxu0 0.0
    %263 = vmatpush.msra.mxu0 0.0
    %264 = vmatpush.msra.mxu0 0.0
    %265 = vmatpush.msra.mxu0 0.0
    %266 = vmatpush.msra.mxu0 %v86
    %267 = vmatpush.msra.mxu0 %v85
    %268 = vmatpush.msra.mxu0 %v84
    %269 = vmatpush.msra.mxu0 %v83
    %270 = vmatmul.f32.gmra.mxu0 %v212
    %v271 = vpop.f32.mrf.mxu0
    %v272 = vadd.f32 %v137, %v271
    %273 = vdwg.mxu0
    %v274 = vadd.f32 %v208, %v232
    %v275 = vxor.u32 %v274, 2147483648
    %v276 = vmul.f32 %v275, 1.442695
    %v277 = vpow.pop %v276
    %v278 = vadd.f32 %v277, 1.0
    %v279 = vrcp.pop %v278
    %v280 = vmul.f32 %v278, %v279
    %v281 = vsub.f32 1.0, %v280
    %v282 = vmul.f32 %v279, %v281
    %v283 = vadd.f32 %v279, %v282
    %vm284 = vweird.f32 %v278
    %vm285 = vweird.f32 %v279
    %vm286 = vmor %vm284, %vm285
    %v287 = vsel %vm286, %v279, %v283
    %v288 = vand.u32 2147483647, %v278
    %vm289 = vcmp.eq.f32.partialorder %v288, 8.507059e+37
    %v290 = vand.u32 %v278, 2147483648
    %v291 = vor.u32 1.1754944e-38, %v290
    %v292 = vsel %vm289, %v291, %v287
    %v293 = vmul.f32 1.0, %v292
    %v294 = vadd.f32 %v209, %v252
    %v295 = vxor.u32 %v294, 2147483648
    %v296 = vmul.f32 %v295, 1.442695
    %v297 = vpow.pop %v296
    %v298 = vadd.f32 %v297, 1.0
    %v299 = vrcp.pop %v298
    %v300 = vmul.f32 %v298, %v299
    %v301 = vsub.f32 1.0, %v300
    %v302 = vmul.f32 %v299, %v301
    %v303 = vadd.f32 %v299, %v302
    %vm304 = vweird.f32 %v298
    %vm305 = vweird.f32 %v299
    %vm306 = vmor %vm304, %vm305
    %v307 = vsel %vm306, %v299, %v303
    %v308 = vand.u32 2147483647, %v298
    %vm309 = vcmp.eq.f32.partialorder %v308, 8.507059e+37
    %v310 = vand.u32 %v298, 2147483648
    %v311 = vor.u32 1.1754944e-38, %v310
    %v312 = vsel %vm309, %v311, %v307
    %v313 = vmul.f32 1.0, %v312
    %v314 = vmul.f32 %v293, %v272
    %v315 = vadd.f32 %v210, %v314
    %v316 = vtanh.pop %v315
    %v317 = vsub.f32 1.0, %v313
    %v318 = vmul.f32 %v317, %v316
    %v319 = vmul.f32 %v313, %v205
    %v320 = vadd.f32 %v318, %v319
    %s321 = scalar_lea.vmem [#allocation9], 8
    %322 = vst.msk [vmem:[%s321] sm:$0xff] %vm92, %v320
    %s323 = scalar_lea.vmem [#allocation3], 48
    %v324 = vld [vmem:[%s323] sm:$0xff]
    %v325 = vld [vmem:[%s323 + $0x8] sm:$0xff]
    %v326 = vld [vmem:[%s323 + $0x10] sm:$0xff]
    %v328 = vsel %vm92, %v320, 0
    %330 = vmatpush.msra.mxu0 0.0
    %331 = vmatpush.msra.mxu0 0.0
    %332 = vmatpush.msra.mxu0 0.0
    %333 = vmatpush.msra.mxu0 0.0
    %334 = vmatpush.msra.mxu0 0.0
    %335 = vmatpush.msra.mxu0 0.0
    %336 = vmatpush.msra.mxu0 0.0
    %337 = vmatpush.msra.mxu0 0.0
    %338 = vmatpush.msra.mxu0 0.0
    %339 = vmatpush.msra.mxu0 0.0
    %340 = vmatpush.msra.mxu0 0.0
    %341 = vmatpush.msra.mxu0 0.0
    %342 = vmatpush.msra.mxu0 %v76
    %343 = vmatpush.msra.mxu0 %v75
    %344 = vmatpush.msra.mxu0 %v74
    %345 = vmatpush.msra.mxu0 %v73
    %346 = vmatmul.f32.gmra.mxu0 %v328
    %v347 = vpop.f32.mrf.mxu0
    %v348 = vadd.f32 0.0, %v347
    %349 = vdwg.mxu0
    %350 = vmatpush.msra.mxu0 0.0
    %351 = vmatpush.msra.mxu0 0.0
    %352 = vmatpush.msra.mxu0 0.0
    %353 = vmatpush.msra.mxu0 0.0
    %354 = vmatpush.msra.mxu0 0.0
    %355 = vmatpush.msra.mxu0 0.0
    %356 = vmatpush.msra.mxu0 0.0
    %357 = vmatpush.msra.mxu0 0.0
    %358 = vmatpush.msra.mxu0 0.0
    %359 = vmatpush.msra.mxu0 0.0
    %360 = vmatpush.msra.mxu0 0.0
    %361 = vmatpush.msra.mxu0 0.0
    %362 = vmatpush.msra.mxu0 %v81
    %363 = vmatpush.msra.mxu0 %v80
    %364 = vmatpush.msra.mxu0 %v79
    %365 = vmatpush.msra.mxu0 %v78
    %366 = vmatmul.f32.gmra.mxu0 %v328
    %v367 = vpop.f32.mrf.mxu0
    %v368 = vadd.f32 0.0, %v367
    %369 = vdwg.mxu0
    %370 = vmatpush.msra.mxu0 0.0
    %371 = vmatpush.msra.mxu0 0.0
    %372 = vmatpush.msra.mxu0 0.0
    %373 = vmatpush.msra.mxu0 0.0
    %374 = vmatpush.msra.mxu0 0.0
    %375 = vmatpush.msra.mxu0 0.0
    %376 = vmatpush.msra.mxu0 0.0
    %377 = vmatpush.msra.mxu0 0.0
    %378 = vmatpush.msra.mxu0 0.0
    %379 = vmatpush.msra.mxu0 0.0
    %380 = vmatpush.msra.mxu0 0.0
    %381 = vmatpush.msra.mxu0 0.0
    %382 = vmatpush.msra.mxu0 %v86
    %383 = vmatpush.msra.mxu0 %v85
    %384 = vmatpush.msra.mxu0 %v84
    %385 = vmatpush.msra.mxu0 %v83
    %386 = vmatmul.f32.gmra.mxu0 %v328
    %v387 = vpop.f32.mrf.mxu0
    %v388 = vadd.f32 %v137, %v387
    %389 = vdwg.mxu0
    %v390 = vadd.f32 %v324, %v348
    %v391 = vxor.u32 %v390, 2147483648
    %v392 = vmul.f32 %v391, 1.442695
    %v393 = vpow.pop %v392
    %v394 = vadd.f32 %v393, 1.0
    %v395 = vrcp.pop %v394
    %v396 = vmul.f32 %v394, %v395
    %v397 = vsub.f32 1.0, %v396
    %v398 = vmul.f32 %v395, %v397
    %v399 = vadd.f32 %v395, %v398
    %vm400 = vweird.f32 %v394
    %vm401 = vweird.f32 %v395
    %vm402 = vmor %vm400, %vm401
    %v403 = vsel %vm402, %v395, %v399
    %v404 = vand.u32 2147483647, %v394
    %vm405 = vcmp.eq.f32.partialorder %v404, 8.507059e+37
    %v406 = vand.u32 %v394, 2147483648
    %v407 = vor.u32 1.1754944e-38, %v406
    %v408 = vsel %vm405, %v407, %v403
    %v409 = vmul.f32 1.0, %v408
    %v410 = vadd.f32 %v325, %v368
    %v411 = vxor.u32 %v410, 2147483648
    %v412 = vmul.f32 %v411, 1.442695
    %v413 = vpow.pop %v412
    %v414 = vadd.f32 %v413, 1.0
    %v415 = vrcp.pop %v414
    %v416 = vmul.f32 %v414, %v415
    %v417 = vsub.f32 1.0, %v416
    %v418 = vmul.f32 %v415, %v417
    %v419 = vadd.f32 %v415, %v418
    %vm420 = vweird.f32 %v414
    %vm421 = vweird.f32 %v415
    %vm422 = vmor %vm420, %vm421
    %v423 = vsel %vm422, %v415, %v419
    %v424 = vand.u32 2147483647, %v414
    %vm425 = vcmp.eq.f32.partialorder %v424, 8.507059e+37
    %v426 = vand.u32 %v414, 2147483648
    %v427 = vor.u32 1.1754944e-38, %v426
    %v428 = vsel %vm425, %v427, %v423
    %v429 = vmul.f32 1.0, %v428
    %v430 = vmul.f32 %v409, %v388
    %v431 = vadd.f32 %v326, %v430
    %v432 = vtanh.pop %v431
    %v433 = vsub.f32 1.0, %v429
    %v434 = vmul.f32 %v433, %v432
    %v435 = vmul.f32 %v429, %v320
    %v436 = vadd.f32 %v434, %v435
    %s437 = scalar_lea.vmem [#allocation9], 16
    %438 = vst.msk [vmem:[%s437] sm:$0xff] %vm92, %v436
    %s439 = scalar_lea.vmem [#allocation3], 72
    %v440 = vld [vmem:[%s439] sm:$0xff]
    %v441 = vld [vmem:[%s439 + $0x8] sm:$0xff]
    %v442 = vld [vmem:[%s439 + $0x10] sm:$0xff]
    %v444 = vsel %vm92, %v436, 0
    %446 = vmatpush.msra.mxu0 0.0
    %447 = vmatpush.msra.mxu0 0.0
    %448 = vmatpush.msra.mxu0 0.0
    %449 = vmatpush.msra.mxu0 0.0
    %450 = vmatpush.msra.mxu0 0.0
    %451 = vmatpush.msra.mxu0 0.0
    %452 = vmatpush.msra.mxu0 0.0
    %453 = vmatpush.msra.mxu0 0.0
    %454 = vmatpush.msra.mxu0 0.0
    %455 = vmatpush.msra.mxu0 0.0
    %456 = vmatpush.msra.mxu0 0.0
    %457 = vmatpush.msra.mxu0 0.0
    %458 = vmatpush.msra.mxu0 %v76
    %459 = vmatpush.msra.mxu0 %v75
    %460 = vmatpush.msra.mxu0 %v74
    %461 = vmatpush.msra.mxu0 %v73
    %462 = vmatmul.f32.gmra.mxu0 %v444
    %v463 = vpop.f32.mrf.mxu0
    %v464 = vadd.f32 0.0, %v463
    %465 = vdwg.mxu0
    %466 = vmatpush.msra.mxu0 0.0
    %467 = vmatpush.msra.mxu0 0.0
    %468 = vmatpush.msra.mxu0 0.0
    %469 = vmatpush.msra.mxu0 0.0
    %470 = vmatpush.msra.mxu0 0.0
    %471 = vmatpush.msra.mxu0 0.0
    %472 = vmatpush.msra.mxu0 0.0
    %473 = vmatpush.msra.mxu0 0.0
    %474 = vmatpush.msra.mxu0 0.0
    %475 = vmatpush.msra.mxu0 0.0
    %476 = vmatpush.msra.mxu0 0.0
    %477 = vmatpush.msra.mxu0 0.0
    %478 = vmatpush.msra.mxu0 %v81
    %479 = vmatpush.msra.mxu0 %v80
    %480 = vmatpush.msra.mxu0 %v79
    %481 = vmatpush.msra.mxu0 %v78
    %482 = vmatmul.f32.gmra.mxu0 %v444
    %v483 = vpop.f32.mrf.mxu0
    %v484 = vadd.f32 0.0, %v483
    %485 = vdwg.mxu0
    %486 = vmatpush.msra.mxu0 0.0
    %487 = vmatpush.msra.mxu0 0.0
    %488 = vmatpush.msra.mxu0 0.0
    %489 = vmatpush.msra.mxu0 0.0
    %490 = vmatpush.msra.mxu0 0.0
    %491 = vmatpush.msra.mxu0 0.0
    %492 = vmatpush.msra.mxu0 0.0
    %493 = vmatpush.msra.mxu0 0.0
    %494 = vmatpush.msra.mxu0 0.0
    %495 = vmatpush.msra.mxu0 0.0
    %496 = vmatpush.msra.mxu0 0.0
    %497 = vmatpush.msra.mxu0 0.0
    %498 = vmatpush.msra.mxu0 %v86
    %499 = vmatpush.msra.mxu0 %v85
    %500 = vmatpush.msra.mxu0 %v84
    %501 = vmatpush.msra.mxu0 %v83
    %502 = vmatmul.f32.gmra.mxu0 %v444
    %v503 = vpop.f32.mrf.mxu0
    %v504 = vadd.f32 %v137, %v503
    %505 = vdwg.mxu0
    %v506 = vadd.f32 %v440, %v464
    %v507 = vxor.u32 %v506, 2147483648
    %v508 = vmul.f32 %v507, 1.442695
    %v509 = vpow.pop %v508
    %v510 = vadd.f32 %v509, 1.0
    %v511 = vrcp.pop %v510
    %v512 = vmul.f32 %v510, %v511
    %v513 = vsub.f32 1.0, %v512
    %v514 = vmul.f32 %v511, %v513
    %v515 = vadd.f32 %v511, %v514
    %vm516 = vweird.f32 %v510
    %vm517 = vweird.f32 %v511
    %vm518 = vmor %vm516, %vm517
    %v519 = vsel %vm518, %v511, %v515
    %v520 = vand.u32 2147483647, %v510
    %vm521 = vcmp.eq.f32.partialorder %v520, 8.507059e+37
    %v522 = vand.u32 %v510, 2147483648
    %v523 = vor.u32 1.1754944e-38, %v522
    %v524 = vsel %vm521, %v523, %v519
    %v525 = vmul.f32 1.0, %v524
    %v526 = vadd.f32 %v441, %v484
    %v527 = vxor.u32 %v526, 2147483648
    %v528 = vmul.f32 %v527, 1.442695
    %v529 = vpow.pop %v528
    %v530 = vadd.f32 %v529, 1.0
    %v531 = vrcp.pop %v530
    %v532 = vmul.f32 %v530, %v531
    %v533 = vsub.f32 1.0, %v532
    %v534 = vmul.f32 %v531, %v533
    %v535 = vadd.f32 %v531, %v534
    %vm536 = vweird.f32 %v530
    %vm537 = vweird.f32 %v531
    %vm538 = vmor %vm536, %vm537
    %v539 = vsel %vm538, %v531, %v535
    %v540 = vand.u32 2147483647, %v530
    %vm541 = vcmp.eq.f32.partialorder %v540, 8.507059e+37
    %v542 = vand.u32 %v530, 2147483648
    %v543 = vor.u32 1.1754944e-38, %v542
    %v544 = vsel %vm541, %v543, %v539
    %v545 = vmul.f32 1.0, %v544
    %v546 = vmul.f32 %v525, %v504
    %v547 = vadd.f32 %v442, %v546
    %v548 = vtanh.pop %v547
    %v549 = vsub.f32 1.0, %v545
    %v550 = vmul.f32 %v549, %v548
    %v551 = vmul.f32 %v545, %v436
    %v552 = vadd.f32 %v550, %v551
    %s553 = scalar_lea.vmem [#allocation9], 24
    %554 = vst.msk [vmem:[%s553] sm:$0xff] %vm92, %v552
    %s555 = scalar_lea.vmem [#allocation3], 96
    %v556 = vld [vmem:[%s555] sm:$0xff]
    %v557 = vld [vmem:[%s555 + $0x8] sm:$0xff]
    %v558 = vld [vmem:[%s555 + $0x10] sm:$0xff]
    %v560 = vsel %vm92, %v552, 0
    %562 = vmatpush.msra.mxu0 0.0
    %563 = vmatpush.msra.mxu0 0.0
    %564 = vmatpush.msra.mxu0 0.0
    %565 = vmatpush.msra.mxu0 0.0
    %566 = vmatpush.msra.mxu0 0.0
    %567 = vmatpush.msra.mxu0 0.0
    %568 = vmatpush.msra.mxu0 0.0
    %569 = vmatpush.msra.mxu0 0.0
    %570 = vmatpush.msra.mxu0 0.0
    %571 = vmatpush.msra.mxu0 0.0
    %572 = vmatpush.msra.mxu0 0.0
    %573 = vmatpush.msra.mxu0 0.0
    %574 = vmatpush.msra.mxu0 %v76
    %575 = vmatpush.msra.mxu0 %v75
    %576 = vmatpush.msra.mxu0 %v74
    %577 = vmatpush.msra.mxu0 %v73
    %578 = vmatmul.f32.gmra.mxu0 %v560
    %v579 = vpop.f32.mrf.mxu0
    %v580 = vadd.f32 0.0, %v579
    %581 = vdwg.mxu0
    %582 = vmatpush.msra.mxu0 0.0
    %583 = vmatpush.msra.mxu0 0.0
    %584 = vmatpush.msra.mxu0 0.0
    %585 = vmatpush.msra.mxu0 0.0
    %586 = vmatpush.msra.mxu0 0.0
    %587 = vmatpush.msra.mxu0 0.0
    %588 = vmatpush.msra.mxu0 0.0
    %589 = vmatpush.msra.mxu0 0.0
    %590 = vmatpush.msra.mxu0 0.0
    %591 = vmatpush.msra.mxu0 0.0
    %592 = vmatpush.msra.mxu0 0.0
    %593 = vmatpush.msra.mxu0 0.0
    %594 = vmatpush.msra.mxu0 %v81
    %595 = vmatpush.msra.mxu0 %v80
    %596 = vmatpush.msra.mxu0 %v79
    %597 = vmatpush.msra.mxu0 %v78
    %598 = vmatmul.f32.gmra.mxu0 %v560
    %v599 = vpop.f32.mrf.mxu0
    %v600 = vadd.f32 0.0, %v599
    %601 = vdwg.mxu0
    %602 = vmatpush.msra.mxu0 0.0
    %603 = vmatpush.msra.mxu0 0.0
    %604 = vmatpush.msra.mxu0 0.0
    %605 = vmatpush.msra.mxu0 0.0
    %606 = vmatpush.msra.mxu0 0.0
    %607 = vmatpush.msra.mxu0 0.0
    %608 = vmatpush.msra.mxu0 0.0
    %609 = vmatpush.msra.mxu0 0.0
    %610 = vmatpush.msra.mxu0 0.0
    %611 = vmatpush.msra.mxu0 0.0
    %612 = vmatpush.msra.mxu0 0.0
    %613 = vmatpush.msra.mxu0 0.0
    %614 = vmatpush.msra.mxu0 %v86
    %615 = vmatpush.msra.mxu0 %v85
    %616 = vmatpush.msra.mxu0 %v84
    %617 = vmatpush.msra.mxu0 %v83
    %618 = vmatmul.f32.gmra.mxu0 %v560
    %v619 = vpop.f32.mrf.mxu0
    %v620 = vadd.f32 %v137, %v619
    %621 = vdwg.mxu0
    %v622 = vadd.f32 %v556, %v580
    %v623 = vxor.u32 %v622, 2147483648
    %v624 = vmul.f32 %v623, 1.442695
    %v625 = vpow.pop %v624
    %v626 = vadd.f32 %v625, 1.0
    %v627 = vrcp.pop %v626
    %v628 = vmul.f32 %v626, %v627
    %v629 = vsub.f32 1.0, %v628
    %v630 = vmul.f32 %v627, %v629
    %v631 = vadd.f32 %v627, %v630
    %vm632 = vweird.f32 %v626
    %vm633 = vweird.f32 %v627
    %vm634 = vmor %vm632, %vm633
    %v635 = vsel %vm634, %v627, %v631
    %v636 = vand.u32 2147483647, %v626
    %vm637 = vcmp.eq.f32.partialorder %v636, 8.507059e+37
    %v638 = vand.u32 %v626, 2147483648
    %v639 = vor.u32 1.1754944e-38, %v638
    %v640 = vsel %vm637, %v639, %v635
    %v641 = vmul.f32 1.0, %v640
    %v642 = vadd.f32 %v557, %v600
    %v643 = vxor.u32 %v642, 2147483648
    %v644 = vmul.f32 %v643, 1.442695
    %v645 = vpow.pop %v644
    %v646 = vadd.f32 %v645, 1.0
    %v647 = vrcp.pop %v646
    %v648 = vmul.f32 %v646, %v647
    %v649 = vsub.f32 1.0, %v648
    %v650 = vmul.f32 %v647, %v649
    %v651 = vadd.f32 %v647, %v650
    %vm652 = vweird.f32 %v646
    %vm653 = vweird.f32 %v647
    %vm654 = vmor %vm652, %vm653
    %v655 = vsel %vm654, %v647, %v651
    %v656 = vand.u32 2147483647, %v646
    %vm657 = vcmp.eq.f32.partialorder %v656, 8.507059e+37
    %v658 = vand.u32 %v646, 2147483648
    %v659 = vor.u32 1.1754944e-38, %v658
    %v660 = vsel %vm657, %v659, %v655
    %v661 = vmul.f32 1.0, %v660
    %v662 = vmul.f32 %v641, %v620
    %v663 = vadd.f32 %v558, %v662
    %v664 = vtanh.pop %v663
    %v665 = vsub.f32 1.0, %v661
    %v666 = vmul.f32 %v665, %v664
    %v667 = vmul.f32 %v661, %v552
    %v668 = vadd.f32 %v666, %v667
    %s669 = scalar_lea.vmem [#allocation9], 32
    %670 = vst.msk [vmem:[%s669] sm:$0xff] %vm92, %v668
    %s671 = scalar_lea.vmem [#allocation3], 120
    %v672 = vld [vmem:[%s671] sm:$0xff]
    %v673 = vld [vmem:[%s671 + $0x8] sm:$0xff]
    %v674 = vld [vmem:[%s671 + $0x10] sm:$0xff]
    %v676 = vsel %vm92, %v668, 0
    %678 = vmatpush.msra.mxu0 0.0
    %679 = vmatpush.msra.mxu0 0.0
    %680 = vmatpush.msra.mxu0 0.0
    %681 = vmatpush.msra.mxu0 0.0
    %682 = vmatpush.msra.mxu0 0.0
    %683 = vmatpush.msra.mxu0 0.0
    %684 = vmatpush.msra.mxu0 0.0
    %685 = vmatpush.msra.mxu0 0.0
    %686 = vmatpush.msra.mxu0 0.0
    %687 = vmatpush.msra.mxu0 0.0
    %688 = vmatpush.msra.mxu0 0.0
    %689 = vmatpush.msra.mxu0 0.0
    %690 = vmatpush.msra.mxu0 %v76
    %691 = vmatpush.msra.mxu0 %v75
    %692 = vmatpush.msra.mxu0 %v74
    %693 = vmatpush.msra.mxu0 %v73
    %694 = vmatmul.f32.gmra.mxu0 %v676
    %v695 = vpop.f32.mrf.mxu0
    %v696 = vadd.f32 0.0, %v695
    %697 = vdwg.mxu0
    %698 = vmatpush.msra.mxu0 0.0
    %699 = vmatpush.msra.mxu0 0.0
    %700 = vmatpush.msra.mxu0 0.0
    %701 = vmatpush.msra.mxu0 0.0
    %702 = vmatpush.msra.mxu0 0.0
    %703 = vmatpush.msra.mxu0 0.0
    %704 = vmatpush.msra.mxu0 0.0
    %705 = vmatpush.msra.mxu0 0.0
    %706 = vmatpush.msra.mxu0 0.0
    %707 = vmatpush.msra.mxu0 0.0
    %708 = vmatpush.msra.mxu0 0.0
    %709 = vmatpush.msra.mxu0 0.0
    %710 = vmatpush.msra.mxu0 %v81
    %711 = vmatpush.msra.mxu0 %v80
    %712 = vmatpush.msra.mxu0 %v79
    %713 = vmatpush.msra.mxu0 %v78
    %714 = vmatmul.f32.gmra.mxu0 %v676
    %v715 = vpop.f32.mrf.mxu0
    %v716 = vadd.f32 0.0, %v715
    %717 = vdwg.mxu0
    %718 = vmatpush.msra.mxu0 0.0
    %719 = vmatpush.msra.mxu0 0.0
    %720 = vmatpush.msra.mxu0 0.0
    %721 = vmatpush.msra.mxu0 0.0
    %722 = vmatpush.msra.mxu0 0.0
    %723 = vmatpush.msra.mxu0 0.0
    %724 = vmatpush.msra.mxu0 0.0
    %725 = vmatpush.msra.mxu0 0.0
    %726 = vmatpush.msra.mxu0 0.0
    %727 = vmatpush.msra.mxu0 0.0
    %728 = vmatpush.msra.mxu0 0.0
    %729 = vmatpush.msra.mxu0 0.0
    %730 = vmatpush.msra.mxu0 %v86
    %731 = vmatpush.msra.mxu0 %v85
    %732 = vmatpush.msra.mxu0 %v84
    %733 = vmatpush.msra.mxu0 %v83
    %734 = vmatmul.f32.gmra.mxu0 %v676
    %v735 = vpop.f32.mrf.mxu0
    %v736 = vadd.f32 %v137, %v735
    %737 = vdwg.mxu0
    %v738 = vadd.f32 %v672, %v696
    %v739 = vxor.u32 %v738, 2147483648
    %v740 = vmul.f32 %v739, 1.442695
    %v741 = vpow.pop %v740
    %v742 = vadd.f32 %v741, 1.0
    %v743 = vrcp.pop %v742
    %v744 = vmul.f32 %v742, %v743
    %v745 = vsub.f32 1.0, %v744
    %v746 = vmul.f32 %v743, %v745
    %v747 = vadd.f32 %v743, %v746
    %vm748 = vweird.f32 %v742
    %vm749 = vweird.f32 %v743
    %vm750 = vmor %vm748, %vm749
    %v751 = vsel %vm750, %v743, %v747
    %v752 = vand.u32 2147483647, %v742
    %vm753 = vcmp.eq.f32.partialorder %v752, 8.507059e+37
    %v754 = vand.u32 %v742, 2147483648
    %v755 = vor.u32 1.1754944e-38, %v754
    %v756 = vsel %vm753, %v755, %v751
    %v757 = vmul.f32 1.0, %v756
    %v758 = vadd.f32 %v673, %v716
    %v759 = vxor.u32 %v758, 2147483648
    %v760 = vmul.f32 %v759, 1.442695
    %v761 = vpow.pop %v760
    %v762 = vadd.f32 %v761, 1.0
    %v763 = vrcp.pop %v762
    %v764 = vmul.f32 %v762, %v763
    %v765 = vsub.f32 1.0, %v764
    %v766 = vmul.f32 %v763, %v765
    %v767 = vadd.f32 %v763, %v766
    %vm768 = vweird.f32 %v762
    %vm769 = vweird.f32 %v763
    %vm770 = vmor %vm768, %vm769
    %v771 = vsel %vm770, %v763, %v767
    %v772 = vand.u32 2147483647, %v762
    %vm773 = vcmp.eq.f32.partialorder %v772, 8.507059e+37
    %v774 = vand.u32 %v762, 2147483648
    %v775 = vor.u32 1.1754944e-38, %v774
    %v776 = vsel %vm773, %v775, %v771
    %v777 = vmul.f32 1.0, %v776
    %v778 = vmul.f32 %v757, %v736
    %v779 = vadd.f32 %v674, %v778
    %v780 = vtanh.pop %v779
    %v781 = vsub.f32 1.0, %v777
    %v782 = vmul.f32 %v781, %v780
    %v783 = vmul.f32 %v777, %v668
    %v784 = vadd.f32 %v782, %v783
    %s785 = scalar_lea.vmem [#allocation9], 40
    %786 = vst.msk [vmem:[%s785] sm:$0xff] %vm92, %v784
    %s787 = scalar_lea.vmem [#allocation3], 144
    %v788 = vld [vmem:[%s787] sm:$0xff]
    %v789 = vld [vmem:[%s787 + $0x8] sm:$0xff]
    %v790 = vld [vmem:[%s787 + $0x10] sm:$0xff]
    %v792 = vsel %vm92, %v784, 0
    %794 = vmatpush.msra.mxu0 0.0
    %795 = vmatpush.msra.mxu0 0.0
    %796 = vmatpush.msra.mxu0 0.0
    %797 = vmatpush.msra.mxu0 0.0
    %798 = vmatpush.msra.mxu0 0.0
    %799 = vmatpush.msra.mxu0 0.0
    %800 = vmatpush.msra.mxu0 0.0
    %801 = vmatpush.msra.mxu0 0.0
    %802 = vmatpush.msra.mxu0 0.0
    %803 = vmatpush.msra.mxu0 0.0
    %804 = vmatpush.msra.mxu0 0.0
    %805 = vmatpush.msra.mxu0 0.0
    %806 = vmatpush.msra.mxu0 %v76
    %807 = vmatpush.msra.mxu0 %v75
    %808 = vmatpush.msra.mxu0 %v74
    %809 = vmatpush.msra.mxu0 %v73
    %810 = vmatmul.f32.gmra.mxu0 %v792
    %v811 = vpop.f32.mrf.mxu0
    %v812 = vadd.f32 0.0, %v811
    %813 = vdwg.mxu0
    %814 = vmatpush.msra.mxu0 0.0
    %815 = vmatpush.msra.mxu0 0.0
    %816 = vmatpush.msra.mxu0 0.0
    %817 = vmatpush.msra.mxu0 0.0
    %818 = vmatpush.msra.mxu0 0.0
    %819 = vmatpush.msra.mxu0 0.0
    %820 = vmatpush.msra.mxu0 0.0
    %821 = vmatpush.msra.mxu0 0.0
    %822 = vmatpush.msra.mxu0 0.0
    %823 = vmatpush.msra.mxu0 0.0
    %824 = vmatpush.msra.mxu0 0.0
    %825 = vmatpush.msra.mxu0 0.0
    %826 = vmatpush.msra.mxu0 %v81
    %827 = vmatpush.msra.mxu0 %v80
    %828 = vmatpush.msra.mxu0 %v79
    %829 = vmatpush.msra.mxu0 %v78
    %830 = vmatmul.f32.gmra.mxu0 %v792
    %v831 = vpop.f32.mrf.mxu0
    %v832 = vadd.f32 0.0, %v831
    %833 = vdwg.mxu0
    %834 = vmatpush.msra.mxu0 0.0
    %835 = vmatpush.msra.mxu0 0.0
    %836 = vmatpush.msra.mxu0 0.0
    %837 = vmatpush.msra.mxu0 0.0
    %838 = vmatpush.msra.mxu0 0.0
    %839 = vmatpush.msra.mxu0 0.0
    %840 = vmatpush.msra.mxu0 0.0
    %841 = vmatpush.msra.mxu0 0.0
    %842 = vmatpush.msra.mxu0 0.0
    %843 = vmatpush.msra.mxu0 0.0
    %844 = vmatpush.msra.mxu0 0.0
    %845 = vmatpush.msra.mxu0 0.0
    %846 = vmatpush.msra.mxu0 %v86
    %847 = vmatpush.msra.mxu0 %v85
    %848 = vmatpush.msra.mxu0 %v84
    %849 = vmatpush.msra.mxu0 %v83
    %850 = vmatmul.f32.gmra.mxu0 %v792
    %v851 = vpop.f32.mrf.mxu0
    %v852 = vadd.f32 %v137, %v851
    %853 = vdwg.mxu0
    %v854 = vadd.f32 %v788, %v812
    %v855 = vxor.u32 %v854, 2147483648
    %v856 = vmul.f32 %v855, 1.442695
    %v857 = vpow.pop %v856
    %v858 = vadd.f32 %v857, 1.0
    %v859 = vrcp.pop %v858
    %v860 = vmul.f32 %v858, %v859
    %v861 = vsub.f32 1.0, %v860
    %v862 = vmul.f32 %v859, %v861
    %v863 = vadd.f32 %v859, %v862
    %vm864 = vweird.f32 %v858
    %vm865 = vweird.f32 %v859
    %vm866 = vmor %vm864, %vm865
    %v867 = vsel %vm866, %v859, %v863
    %v868 = vand.u32 2147483647, %v858
    %vm869 = vcmp.eq.f32.partialorder %v868, 8.507059e+37
    %v870 = vand.u32 %v858, 2147483648
    %v871 = vor.u32 1.1754944e-38, %v870
    %v872 = vsel %vm869, %v871, %v867
    %v873 = vmul.f32 1.0, %v872
    %v874 = vadd.f32 %v789, %v832
    %v875 = vxor.u32 %v874, 2147483648
    %v876 = vmul.f32 %v875, 1.442695
    %v877 = vpow.pop %v876
    %v878 = vadd.f32 %v877, 1.0
    %v879 = vrcp.pop %v878
    %v880 = vmul.f32 %v878, %v879
    %v881 = vsub.f32 1.0, %v880
    %v882 = vmul.f32 %v879, %v881
    %v883 = vadd.f32 %v879, %v882
    %vm884 = vweird.f32 %v878
    %vm885 = vweird.f32 %v879
    %vm886 = vmor %vm884, %vm885
    %v887 = vsel %vm886, %v879, %v883
    %v888 = vand.u32 2147483647, %v878
    %vm889 = vcmp.eq.f32.partialorder %v888, 8.507059e+37
    %v890 = vand.u32 %v878, 2147483648
    %v891 = vor.u32 1.1754944e-38, %v890
    %v892 = vsel %vm889, %v891, %v887
    %v893 = vmul.f32 1.0, %v892
    %v894 = vmul.f32 %v873, %v852
    %v895 = vadd.f32 %v790, %v894
    %v896 = vtanh.pop %v895
    %v897 = vsub.f32 1.0, %v893
    %v898 = vmul.f32 %v897, %v896
    %v899 = vmul.f32 %v893, %v784
    %v900 = vadd.f32 %v898, %v899
    %s901 = scalar_lea.vmem [#allocation9], 48
    %902 = vst.msk [vmem:[%s901] sm:$0xff] %vm92, %v900
    %s903 = scalar_lea.vmem [#allocation3], 168
    %v904 = vld [vmem:[%s903] sm:$0xff]
    %v905 = vld [vmem:[%s903 + $0x8] sm:$0xff]
    %v906 = vld [vmem:[%s903 + $0x10] sm:$0xff]
    %v908 = vsel %vm92, %v900, 0
    %910 = vmatpush.msra.mxu0 0.0
    %911 = vmatpush.msra.mxu0 0.0
    %912 = vmatpush.msra.mxu0 0.0
    %913 = vmatpush.msra.mxu0 0.0
    %914 = vmatpush.msra.mxu0 0.0
    %915 = vmatpush.msra.mxu0 0.0
    %916 = vmatpush.msra.mxu0 0.0
    %917 = vmatpush.msra.mxu0 0.0
    %918 = vmatpush.msra.mxu0 0.0
    %919 = vmatpush.msra.mxu0 0.0
    %920 = vmatpush.msra.mxu0 0.0
    %921 = vmatpush.msra.mxu0 0.0
    %922 = vmatpush.msra.mxu0 %v76
    %923 = vmatpush.msra.mxu0 %v75
    %924 = vmatpush.msra.mxu0 %v74
    %925 = vmatpush.msra.mxu0 %v73
    %926 = vmatmul.f32.gmra.mxu0 %v908
    %v927 = vpop.f32.mrf.mxu0
    %v928 = vadd.f32 0.0, %v927
    %929 = vdwg.mxu0
    %930 = vmatpush.msra.mxu0 0.0
    %931 = vmatpush.msra.mxu0 0.0
    %932 = vmatpush.msra.mxu0 0.0
    %933 = vmatpush.msra.mxu0 0.0
    %934 = vmatpush.msra.mxu0 0.0
    %935 = vmatpush.msra.mxu0 0.0
    %936 = vmatpush.msra.mxu0 0.0
    %937 = vmatpush.msra.mxu0 0.0
    %938 = vmatpush.msra.mxu0 0.0
    %939 = vmatpush.msra.mxu0 0.0
    %940 = vmatpush.msra.mxu0 0.0
    %941 = vmatpush.msra.mxu0 0.0
    %942 = vmatpush.msra.mxu0 %v81
    %943 = vmatpush.msra.mxu0 %v80
    %944 = vmatpush.msra.mxu0 %v79
    %945 = vmatpush.msra.mxu0 %v78
    %946 = vmatmul.f32.gmra.mxu0 %v908
    %v947 = vpop.f32.mrf.mxu0
    %v948 = vadd.f32 0.0, %v947
    %949 = vdwg.mxu0
    %950 = vmatpush.msra.mxu0 0.0
    %951 = vmatpush.msra.mxu0 0.0
    %952 = vmatpush.msra.mxu0 0.0
    %953 = vmatpush.msra.mxu0 0.0
    %954 = vmatpush.msra.mxu0 0.0
    %955 = vmatpush.msra.mxu0 0.0
    %956 = vmatpush.msra.mxu0 0.0
    %957 = vmatpush.msra.mxu0 0.0
    %958 = vmatpush.msra.mxu0 0.0
    %959 = vmatpush.msra.mxu0 0.0
    %960 = vmatpush.msra.mxu0 0.0
    %961 = vmatpush.msra.mxu0 0.0
    %962 = vmatpush.msra.mxu0 %v86
    %963 = vmatpush.msra.mxu0 %v85
    %964 = vmatpush.msra.mxu0 %v84
    %965 = vmatpush.msra.mxu0 %v83
    %966 = vmatmul.f32.gmra.mxu0 %v908
    %v967 = vpop.f32.mrf.mxu0
    %v968 = vadd.f32 %v137, %v967
    %969 = vdwg.mxu0
    %v970 = vadd.f32 %v904, %v928
    %v971 = vxor.u32 %v970, 2147483648
    %v972 = vmul.f32 %v971, 1.442695
    %v973 = vpow.pop %v972
    %v974 = vadd.f32 %v973, 1.0
    %v975 = vrcp.pop %v974
    %v976 = vmul.f32 %v974, %v975
    %v977 = vsub.f32 1.0, %v976
    %v978 = vmul.f32 %v975, %v977
    %v979 = vadd.f32 %v975, %v978
    %vm980 = vweird.f32 %v974
    %vm981 = vweird.f32 %v975
    %vm982 = vmor %vm980, %vm981
    %v983 = vsel %vm982, %v975, %v979
    %v984 = vand.u32 2147483647, %v974
    %vm985 = vcmp.eq.f32.partialorder %v984, 8.507059e+37
    %v986 = vand.u32 %v974, 2147483648
    %v987 = vor.u32 1.1754944e-38, %v986
    %v988 = vsel %vm985, %v987, %v983
    %v989 = vmul.f32 1.0, %v988
    %v990 = vadd.f32 %v905, %v948
    %v991 = vxor.u32 %v990, 2147483648
    %v992 = vmul.f32 %v991, 1.442695
    %v993 = vpow.pop %v992
    %v994 = vadd.f32 %v993, 1.0
    %v995 = vrcp.pop %v994
    %v996 = vmul.f32 %v994, %v995
    %v997 = vsub.f32 1.0, %v996
    %v998 = vmul.f32 %v995, %v997
    %v999 = vadd.f32 %v995, %v998
    %vm1000 = vweird.f32 %v994
    %vm1001 = vweird.f32 %v995
    %vm1002 = vmor %vm1000, %vm1001
    %v1003 = vsel %vm1002, %v995, %v999
    %v1004 = vand.u32 2147483647, %v994
    %vm1005 = vcmp.eq.f32.partialorder %v1004, 8.507059e+37
    %v1006 = vand.u32 %v994, 2147483648
    %v1007 = vor.u32 1.1754944e-38, %v1006
    %v1008 = vsel %vm1005, %v1007, %v1003
    %v1009 = vmul.f32 1.0, %v1008
    %v1010 = vmul.f32 %v989, %v968
    %v1011 = vadd.f32 %v906, %v1010
    %v1012 = vtanh.pop %v1011
    %v1013 = vsub.f32 1.0, %v1009
    %v1014 = vmul.f32 %v1013, %v1012
    %v1015 = vmul.f32 %v1009, %v900
    %v1016 = vadd.f32 %v1014, %v1015
    %s1017 = scalar_lea.vmem [#allocation9], 56
    %1018 = vst.msk [vmem:[%s1017] sm:$0xff] %vm92, %v1016
    %1019 = vst.msk [vmem:[#allocation2] sm:$0xff] %vm92, %v1016
    // Predicated region
    $region34: #{tpu_custom_call.1} parent=1 // pred_check
      %p1020 = pneg %p66
    $region35: #{tpu_custom_call.1} parent=1 // pred_check_branch
      %1022 = sbr.rel (%p1020) target = $region37
    $region36: #{tpu_custom_call.1} parent=1 // pred_region
      %1023 = vst.msk [vmem:[#allocation10] sm:$0xff] %vm92, %v1016
    $region37: #{tpu_custom_call.1} parent=1 // pred_fallthru
      _
    // Predicated region
    $region38: #{tpu_custom_call.1} parent=1 // pred_check
      _
    $region39: #{tpu_custom_call.1} parent=1 // pred_check_branch
      %1025 = sbr.rel (0) target = $region41
    $region40: #{tpu_custom_call.1} parent=1 // pred_region
      %1027 = vsyncadd [#allocation5], 0
      %s1028 = sshll.u32 [#allocation9], 4
      %s1029 = int_to_ptr.vmem [resolvable:$true] %s1028
      %s1030 = sshll.u32 %s4, 4
      %s1031 = int_to_ptr.hbm [resolvable:$true] %s1030
      %1036 = dma.vmem_to_hbm [thread:$0]  %s1029, 1024, %s1031, [#allocation5], 128, 128, 8
    $region41: #{tpu_custom_call.1} parent=1 // pred_fallthru
      _
    // Predicated region
    $region42: #{tpu_custom_call.1} parent=1 // pred_check
      _
    $region43: #{tpu_custom_call.1} parent=1 // pred_check_branch
      %1038 = sbr.rel (0) target = $region45
    $region44: #{tpu_custom_call.1} parent=1 // pred_region
      %1040 = vsyncadd [#allocation11], 0
      %s1042 = sshll.u32 [#allocation10], 4
      %s1043 = int_to_ptr.vmem [resolvable:$true] %s1042
      %s1044 = sshll.u32 %s5, 4
      %s1045 = int_to_ptr.hbm [resolvable:$true] %s1044
      %1047 = dma.vmem_to_hbm [thread:$0]  %s1043, 128, %s1045, [#allocation11]
    $region45: #{tpu_custom_call.1} parent=1 // pred_fallthru
      _
    // Predicated region
    $region46: #{tpu_custom_call.1} parent=1 // pred_check
      _
    $region47: #{tpu_custom_call.1} parent=1 // pred_check_branch
      %1049 = sbr.rel (0) target = $region49
    $region48: #{tpu_custom_call.1} parent=1 // pred_region
      %1051 = dma.done [#allocation5], 1024
    $region49: #{tpu_custom_call.1} parent=1 // pred_fallthru
      _
    // Predicated region
    $region50: #{tpu_custom_call.1} parent=1 // pred_check
      _
    $region51: #{tpu_custom_call.1} parent=1 // pred_check_branch
      %1053 = sbr.rel (0) target = $region53
    $region52: #{tpu_custom_call.1} parent=1 // pred_region
      %1055 = dma.done [#allocation11], 128
    $region53: #{tpu_custom_call.1} parent=1 // pred_fallthru
      _
    %1056 = vsyncpa [#allocation4], 1
    %1057 = vsyncpa [#allocation7], 1
    %1058 = vsyncpa [#allocation5], 1
    %1059 = vsyncpa [#allocation11], 1

</llo_original>
